<compile_context>
chip_gen: v7x
topology: tpu7x:2x2x1
jax: 0.10.0
libtpu: 0.0.40
codegen_flags: <defaults>
</compile_context>

<pallas_src>
import functools

import jax
import jax.numpy as jnp
from jax.experimental import pallas as pl
from jax.experimental.pallas import tpu as pltpu

# ---- model dims (robotActor, use_convnext path) ------------------------------
FRAMES = 3                     # frames per sample
FEAT = 256                     # synthetic vision_encoder output dim per frame
BOTTLENECK_IN = FRAMES * FEAT  # = 768, matches nn.Linear(768, 512)
D_BN = 512                     # bottleneck output dim
ACTION_DIM = 64                # synthetic imi_models output dim
OUT_PAD = 128                  # lane-dense padded output width
SINGLE_STEP_MAX_CHW = 2048     # below this, no K grid axis / accumulator at all


def _round_up(x, m):
    return ((x + m - 1) // m) * m


def _choose_bb(batch):
    """Batch rows per block: multiple of 16 (bf16 sublane packing), target 128
    so the fused vision dot pushes FRAMES*BB rows into the MXU, while keeping
    >= 2 batch blocks for large batches (v7x megacore occupancy)."""
    if batch >= 256:
        return 128
    if batch > 128:
        return _round_up((batch + 1) // 2, 16)
    return min(128, _round_up(batch, 16))


def _choose_tk(chw_padded):
    for tk in (1024, 512, 256, 128):
        if chw_padded % tk == 0:
            return tk
    return 128  # unreachable: chw_padded is a multiple of 128


def _epilogue(feats_f32, bv, wbn_ref, bbn_ref, wimi_ref, bimi_ref, o_ref, *, bb):
    """bottleneck Linear(768->512) + imi head Linear(512->ACTION_DIM, padded)."""
    f32 = jnp.float32
    feats = (feats_f32 + bv).astype(jnp.bfloat16)           # (FRAMES*bb, FEAT)
    bn = jnp.zeros((bb, D_BN), f32)
    for f in range(FRAMES):                                  # static, 3 iters
        bn += jnp.dot(feats[f * bb:(f + 1) * bb, :],         # contiguous rows
                      wbn_ref[pl.ds(f * FEAT, FEAT), :],
                      preferred_element_type=f32)
    bn += bbn_ref[...]
    logits = jnp.dot(bn.astype(jnp.bfloat16), wimi_ref[...],
                     preferred_element_type=f32) + bimi_ref[...]
    o_ref[...] = logits.astype(o_ref.dtype)


def _actor_kernel_single(x_ref, wv_ref, bv_ref, wbn_ref, bbn_ref,
                         wimi_ref, bimi_ref, o_ref, *, bb):
    """Small chw: whole reduction in one fused (FRAMES*bb, chw)x(chw, FEAT) dot."""
    feats = jnp.dot(x_ref[...], wv_ref[...], preferred_element_type=jnp.float32)
    _epilogue(feats, bv_ref[...], wbn_ref, bbn_ref, wimi_ref, bimi_ref, o_ref, bb=bb)


def _actor_kernel_ktiled(x_ref, wv_ref, bv_ref, wbn_ref, bbn_ref,
                         wimi_ref, bimi_ref, o_ref, acc_ref, *, bb):
    """Large chw: K-tiled vision matmul with f32 VMEM accumulator."""
    k = pl.program_id(1)

    @pl.when(k == 0)
    def _init():
        acc_ref[...] = jnp.zeros_like(acc_ref)

    acc_ref[...] += jnp.dot(x_ref[...], wv_ref[...],
                            preferred_element_type=jnp.float32)

    @pl.when(k == pl.num_programs(1) - 1)
    def _finalize():
        _epilogue(acc_ref[...], bv_ref[...], wbn_ref, bbn_ref,
                  wimi_ref, bimi_ref, o_ref, bb=bb)


def robot_actor_forward(visual_input, pos_input, params, freeze=True):
    batch, frames, channel, H, W = visual_input.shape
    assert frames == FRAMES and channel == 3                 # .view(-1, 3, H, W)
    chw = channel * H * W

    bb = _choose_bb(batch)
    b_pad = _round_up(batch, bb)
    k_pad = _round_up(chw, 128)
    n_b = b_pad // bb
    ktiled = k_pad > SINGLE_STEP_MAX_CHW
    tk = _choose_tk(k_pad) if ktiled else k_pad
    n_k = k_pad // tk

    # Frame-major-within-block bf16 activations, flattened to 2-D so every grid
    # block is ONE contiguous (FRAMES*bb, k) tile (no in-kernel reshapes).
    # Row order inside a block: frame-major, batch-minor.
    x = visual_input.reshape(batch, frames, chw)
    if b_pad != batch or k_pad != chw:
        x = jnp.pad(x, ((0, b_pad - batch), (0, 0), (0, k_pad - chw)))
    x = jnp.transpose(x.reshape(n_b, bb, FRAMES, k_pad), (0, 2, 1, 3))
    x = x.reshape(n_b * FRAMES * bb, k_pad).astype(jnp.bfloat16)

    # bf16 weights into the MXU; biases / accumulation stay f32.
    wv = params["w_v"].astype(jnp.bfloat16)
    if k_pad != chw:
        wv = jnp.pad(wv, ((0, k_pad - chw), (0, 0)))
    wbn = params["w_bn"].astype(jnp.bfloat16)
    wimi = jnp.pad(params["w_imi"],
                   ((0, 0), (0, OUT_PAD - ACTION_DIM))).astype(jnp.bfloat16)
    bimi = jnp.pad(params["b_imi"], ((0, 0), (0, OUT_PAD - ACTION_DIM)))

    # pos_encoder output is computed and immediately discarded in the original
    # forward (dead code); `freeze` only toggles autograd. Neither affects the
    # forward value -> not executed here.
    del pos_input, freeze

    args = (x, wv, params["b_v"], wbn, params["b_bn"], wimi, bimi)
    out_shape = jax.ShapeDtypeStruct((b_pad, OUT_PAD), jnp.float32)

    flops = (2 * b_pad * FRAMES * k_pad * FEAT
             + 2 * b_pad * BOTTLENECK_IN * D_BN
             + 2 * b_pad * D_BN * OUT_PAD)
    bytes_accessed = (x.size * 2 + wv.size * 2 * (n_b if ktiled else 1)
                      + wbn.size * 2 + wimi.size * 2 + b_pad * OUT_PAD * 4)
    cost = pl.CostEstimate(flops=flops, transcendentals=0,
                           bytes_accessed=bytes_accessed)

    if not ktiled:
        out = pl.pallas_call(
            functools.partial(_actor_kernel_single, bb=bb),
            out_shape=out_shape,
            grid_spec=pltpu.PrefetchScalarGridSpec(
                num_scalar_prefetch=0,
                grid=(n_b,),
                in_specs=[
                    pl.BlockSpec((FRAMES * bb, k_pad), lambda i: (i, 0)),      # x
                    pl.BlockSpec((k_pad, FEAT), lambda i: (0, 0)),             # w_v
                    pl.BlockSpec((1, FEAT), lambda i: (0, 0)),                 # b_v
                    pl.BlockSpec((BOTTLENECK_IN, D_BN), lambda i: (0, 0)),     # w_bn
                    pl.BlockSpec((1, D_BN), lambda i: (0, 0)),                 # b_bn
                    pl.BlockSpec((D_BN, OUT_PAD), lambda i: (0, 0)),           # w_imi
                    pl.BlockSpec((1, OUT_PAD), lambda i: (0, 0)),              # b_imi
                ],
                out_specs=pl.BlockSpec((bb, OUT_PAD), lambda i: (i, 0)),
            ),
            compiler_params=pltpu.CompilerParams(
                dimension_semantics=("parallel",)),
            cost_estimate=cost,
        )(*args)
    else:
        out = pl.pallas_call(
            functools.partial(_actor_kernel_ktiled, bb=bb),
            out_shape=out_shape,
            grid_spec=pltpu.PrefetchScalarGridSpec(
                num_scalar_prefetch=0,
                grid=(n_b, n_k),
                in_specs=[
                    pl.BlockSpec((FRAMES * bb, tk), lambda i, k: (i, k)),      # x
                    pl.BlockSpec((tk, FEAT), lambda i, k: (k, 0)),             # w_v
                    pl.BlockSpec((1, FEAT), lambda i, k: (0, 0)),              # b_v
                    pl.BlockSpec((BOTTLENECK_IN, D_BN), lambda i, k: (0, 0)),  # w_bn
                    pl.BlockSpec((1, D_BN), lambda i, k: (0, 0)),              # b_bn
                    pl.BlockSpec((D_BN, OUT_PAD), lambda i, k: (0, 0)),        # w_imi
                    pl.BlockSpec((1, OUT_PAD), lambda i, k: (0, 0)),           # b_imi
                ],
                out_specs=pl.BlockSpec((bb, OUT_PAD), lambda i, k: (i, 0)),
                scratch_shapes=[pltpu.VMEM((FRAMES * bb, FEAT), jnp.float32)],
            ),
            compiler_params=pltpu.CompilerParams(
                dimension_semantics=("parallel", "arbitrary")),
            cost_estimate=cost,
        )(*args)

    return out[:batch, :ACTION_DIM]


def init_params(key, vis_in_dim, pos_dim):
    ks = jax.random.split(key, 8)
    s = 0.02
    n = lambda k, shp: jax.random.normal(k, shp, jnp.float32) * s
    return {
        "w_v":   n(ks[0], (vis_in_dim, FEAT)),        # synthetic vision_encoder
        "b_v":   n(ks[1], (1, FEAT)),
        "w_bn":  n(ks[2], (BOTTLENECK_IN, D_BN)),     # bottleneck.weight.T
        "b_bn":  n(ks[3], (1, D_BN)),
        "w_imi": n(ks[4], (D_BN, ACTION_DIM)),        # synthetic imi_models
        "b_imi": n(ks[5], (1, ACTION_DIM)),
        "w_pos": n(ks[6], (pos_dim, D_BN)),           # synthetic pos_encoder (dead)
        "b_pos": n(ks[7], (1, D_BN)),
    }


def reference_forward(visual_input, pos_input, params):
    """Pure-JAX (f32) replica of the PyTorch forward, for correctness checking."""
    batch, frames, channel, H, W = visual_input.shape
    x = visual_input.reshape(batch * frames, channel * H * W).astype(jnp.float32)
    visual_feats = x @ params["w_v"] + params["b_v"]                 # vision_encoder
    _pos_feats = pos_input @ params["w_pos"] + params["b_pos"]       # computed, never used
    del _pos_feats
    visual_feats = visual_feats.reshape(batch, frames * FEAT)        # .view(batch, -1)
    embeds = visual_feats @ params["w_bn"] + params["b_bn"]          # bottleneck (use_convnext)
    return embeds @ params["w_imi"] + params["b_imi"]                # imi_models


if __name__ == "__main__":
    key = jax.random.PRNGKey(0)
    k_vis, k_pos, k_par = jax.random.split(key, 3)

    batch, channel, H, W = 16, 3, 16, 16
    pos_dim = 7
    visual_input = jax.random.normal(
        k_vis, (batch, FRAMES, channel, H, W), jnp.float32)
    pos_input = jax.random.normal(k_pos, (batch, pos_dim), jnp.float32)
    params = init_params(k_par, channel * H * W, pos_dim)

    fwd = jax.jit(robot_actor_forward)
    out = jax.block_until_ready(fwd(visual_input, pos_input, params))

    ref = reference_forward(visual_input, pos_input, params)
    assert out.shape == (batch, ACTION_DIM)
    err = float(jnp.max(jnp.abs(out - ref)))
    # bf16 weights/activations in the kernel vs f32 reference: ~1e-3 abs error.
    assert jnp.allclose(out, ref, atol=2e-2, rtol=2e-2), err
    print("KERNEL_OK")
</pallas_src>

<mosaic_0001>
module attributes {stable_mosaic.version = 11 : i64} {
  func.func @_actor_kernel_single(%arg0: i32, %arg1: memref<48x768xbf16, #tpu.memory_space<vmem>>, %arg2: memref<768x256xbf16, #tpu.memory_space<vmem>>, %arg3: memref<1x256xf32, #tpu.memory_space<vmem>>, %arg4: memref<768x512xbf16, #tpu.memory_space<vmem>>, %arg5: memref<1x512xf32, #tpu.memory_space<vmem>>, %arg6: memref<512x128xbf16, #tpu.memory_space<vmem>>, %arg7: memref<1x128xf32, #tpu.memory_space<vmem>>, %arg8: memref<16x128xf32, #tpu.memory_space<vmem>>) attributes {dimension_semantics = [#tpu.dimension_semantics<parallel>], iteration_bounds = array<i64: 1>, scalar_prefetch = 0 : i64, scratch_operands = 0 : i64, tpu.core_type = #tpu.core_type<tc>, window_params = [{transform_indices = @transform_0, window_bounds = array<i64: 48, 768>}, {pipeline_mode = #tpu.pipeline_mode<synchronous>, transform_indices = @transform_1, window_bounds = array<i64: 768, 256>}, {pipeline_mode = #tpu.pipeline_mode<synchronous>, transform_indices = @transform_2, window_bounds = array<i64: 1, 256>}, {pipeline_mode = #tpu.pipeline_mode<synchronous>, transform_indices = @transform_3, window_bounds = array<i64: 768, 512>}, {pipeline_mode = #tpu.pipeline_mode<synchronous>, transform_indices = @transform_4, window_bounds = array<i64: 1, 512>}, {pipeline_mode = #tpu.pipeline_mode<synchronous>, transform_indices = @transform_5, window_bounds = array<i64: 512, 128>}, {pipeline_mode = #tpu.pipeline_mode<synchronous>, transform_indices = @transform_6, window_bounds = array<i64: 1, 128>}, {transform_indices = @transform_7, window_bounds = array<i64: 16, 128>}]} {
    %c0 = arith.constant 0 : index
    %c0_0 = arith.constant 0 : index
    %0 = vector.load %arg1[%c0, %c0_0] : memref<48x768xbf16, #tpu.memory_space<vmem>>, vector<48x768xbf16>
    %c0_1 = arith.constant 0 : index
    %c0_2 = arith.constant 0 : index
    %1 = vector.load %arg2[%c0_1, %c0_2] : memref<768x256xbf16, #tpu.memory_space<vmem>>, vector<768x256xbf16>
    %cst = arith.constant dense<0.000000e+00> : vector<48x256xf32>
    %2 = tpu.matmul %0, %1, %cst {dimension_numbers = #tpu.dot_dimension_numbers<[1], [0], [0], [1], [0, 0, 1, 1], [], []>} : vector<48x768xbf16>, vector<768x256xbf16>, vector<48x256xf32> -> vector<48x256xf32>
    %c0_3 = arith.constant 0 : index
    %c0_4 = arith.constant 0 : index
    %3 = vector.load %arg3[%c0_3, %c0_4] : memref<1x256xf32, #tpu.memory_space<vmem>>, vector<1x256xf32>
    %4 = vector.broadcast %3 : vector<1x256xf32> to vector<48x256xf32>
    %5 = arith.addf %2, %4 : vector<48x256xf32>
    %6 = arith.truncf %5 : vector<48x256xf32> to vector<48x256xbf16>
    %cst_5 = arith.constant 0.000000e+00 : f32
    %7 = vector.broadcast %cst_5 : f32 to vector<16x512xf32>
    %8 = vector.extract_strided_slice %6 {offsets = [0, 0], sizes = [16, 256], strides = [1, 1]} : vector<48x256xbf16> to vector<16x256xbf16>
    %c0_6 = arith.constant 0 : index
    %c0_7 = arith.constant 0 : index
    %9 = vector.load %arg4[%c0_6, %c0_7] : memref<768x512xbf16, #tpu.memory_space<vmem>>, vector<256x512xbf16>
    %cst_8 = arith.constant dense<0.000000e+00> : vector<16x512xf32>
    %10 = tpu.matmul %8, %9, %cst_8 {dimension_numbers = #tpu.dot_dimension_numbers<[1], [0], [0], [1], [0, 0, 1, 1], [], []>} : vector<16x256xbf16>, vector<256x512xbf16>, vector<16x512xf32> -> vector<16x512xf32>
    %11 = arith.addf %7, %10 : vector<16x512xf32>
    %12 = vector.extract_strided_slice %6 {offsets = [16, 0], sizes = [16, 256], strides = [1, 1]} : vector<48x256xbf16> to vector<16x256xbf16>
    %c256 = arith.constant 256 : index
    %c0_9 = arith.constant 0 : index
    %13 = vector.load %arg4[%c256, %c0_9] : memref<768x512xbf16, #tpu.memory_space<vmem>>, vector<256x512xbf16>
    %cst_10 = arith.constant dense<0.000000e+00> : vector<16x512xf32>
    %14 = tpu.matmul %12, %13, %cst_10 {dimension_numbers = #tpu.dot_dimension_numbers<[1], [0], [0], [1], [0, 0, 1, 1], [], []>} : vector<16x256xbf16>, vector<256x512xbf16>, vector<16x512xf32> -> vector<16x512xf32>
    %15 = arith.addf %11, %14 : vector<16x512xf32>
    %16 = vector.extract_strided_slice %6 {offsets = [32, 0], sizes = [16, 256], strides = [1, 1]} : vector<48x256xbf16> to vector<16x256xbf16>
    %c512 = arith.constant 512 : index
    %c0_11 = arith.constant 0 : index
    %17 = vector.load %arg4[%c512, %c0_11] : memref<768x512xbf16, #tpu.memory_space<vmem>>, vector<256x512xbf16>
    %cst_12 = arith.constant dense<0.000000e+00> : vector<16x512xf32>
    %18 = tpu.matmul %16, %17, %cst_12 {dimension_numbers = #tpu.dot_dimension_numbers<[1], [0], [0], [1], [0, 0, 1, 1], [], []>} : vector<16x256xbf16>, vector<256x512xbf16>, vector<16x512xf32> -> vector<16x512xf32>
    %19 = arith.addf %15, %18 : vector<16x512xf32>
    %c0_13 = arith.constant 0 : index
    %c0_14 = arith.constant 0 : index
    %20 = vector.load %arg5[%c0_13, %c0_14] : memref<1x512xf32, #tpu.memory_space<vmem>>, vector<1x512xf32>
    %21 = vector.broadcast %20 : vector<1x512xf32> to vector<16x512xf32>
    %22 = arith.addf %19, %21 : vector<16x512xf32>
    %23 = arith.truncf %22 : vector<16x512xf32> to vector<16x512xbf16>
    %c0_15 = arith.constant 0 : index
    %c0_16 = arith.constant 0 : index
    %24 = vector.load %arg6[%c0_15, %c0_16] : memref<512x128xbf16, #tpu.memory_space<vmem>>, vector<512x128xbf16>
    %cst_17 = arith.constant dense<0.000000e+00> : vector<16x128xf32>
    %25 = tpu.matmul %23, %24, %cst_17 {dimension_numbers = #tpu.dot_dimension_numbers<[1], [0], [0], [1], [0, 0, 1, 1], [], []>} : vector<16x512xbf16>, vector<512x128xbf16>, vector<16x128xf32> -> vector<16x128xf32>
    %c0_18 = arith.constant 0 : index
    %c0_19 = arith.constant 0 : index
    %26 = vector.load %arg7[%c0_18, %c0_19] : memref<1x128xf32, #tpu.memory_space<vmem>>, vector<1x128xf32>
    %27 = vector.broadcast %26 : vector<1x128xf32> to vector<16x128xf32>
    %28 = arith.addf %25, %27 : vector<16x128xf32>
    %c0_20 = arith.constant 0 : index
    %c0_21 = arith.constant 0 : index
    %29 = vector.load %arg8[%c0_20, %c0_21] : memref<16x128xf32, #tpu.memory_space<vmem>>, vector<16x128xf32>
    tpu.vector_store %arg8[%c0_20, %c0_21], %28 {strides = array<i32>} : memref<16x128xf32, #tpu.memory_space<vmem>>, vector<16x128xf32>,
    return
  }
  func.func @transform_0(%arg0: i32) -> (i32, i32) {
    %c0_i32 = arith.constant 0 : i32
    %c0_i32_0 = arith.constant 0 : i32
    return %arg0, %c0_i32 : i32, i32
  }
  func.func @transform_1(%arg0: i32) -> (i32, i32) {
    %c0_i32 = arith.constant 0 : i32
    %c0_i32_0 = arith.constant 0 : i32
    %c0_i32_1 = arith.constant 0 : i32
    return %c0_i32, %c0_i32_0 : i32, i32
  }
  func.func @transform_2(%arg0: i32) -> (i32, i32) {
    %c0_i32 = arith.constant 0 : i32
    %c0_i32_0 = arith.constant 0 : i32
    %c0_i32_1 = arith.constant 0 : i32
    return %c0_i32, %c0_i32_0 : i32, i32
  }
  func.func @transform_3(%arg0: i32) -> (i32, i32) {
    %c0_i32 = arith.constant 0 : i32
    %c0_i32_0 = arith.constant 0 : i32
    %c0_i32_1 = arith.constant 0 : i32
    return %c0_i32, %c0_i32_0 : i32, i32
  }
  func.func @transform_4(%arg0: i32) -> (i32, i32) {
    %c0_i32 = arith.constant 0 : i32
    %c0_i32_0 = arith.constant 0 : i32
    %c0_i32_1 = arith.constant 0 : i32
    return %c0_i32, %c0_i32_0 : i32, i32
  }
  func.func @transform_5(%arg0: i32) -> (i32, i32) {
    %c0_i32 = arith.constant 0 : i32
    %c0_i32_0 = arith.constant 0 : i32
    %c0_i32_1 = arith.constant 0 : i32
    return %c0_i32, %c0_i32_0 : i32, i32
  }
  func.func @transform_6(%arg0: i32) -> (i32, i32) {
    %c0_i32 = arith.constant 0 : i32
    %c0_i32_0 = arith.constant 0 : i32
    %c0_i32_1 = arith.constant 0 : i32
    return %c0_i32, %c0_i32_0 : i32, i32
  }
  func.func @transform_7(%arg0: i32) -> (i32, i32) {
    %c0_i32 = arith.constant 0 : i32
    %c0_i32_0 = arith.constant 0 : i32
    return %arg0, %c0_i32 : i32, i32
  }
}

</mosaic_0001>

<llo_original>
// kernel: robot_actor_forward.1
$region0: #{robot_actor_forward.1}
  #allocation0 [shape = 'u32[]', space=smem, size = 0x4, offset = 0x4, fixed_abs, tag = 'smem constant byte address 0x4 - core index']
  #allocation1 [shape = 'u32[144,128]{1,0:T(1,128)}', space=vmem, size = 0x12000, scoped, tag = 'internal scratch']
  %s0 = inlined_call_operand.vmem [shape: bf16[48,768], index: 0, kind: input, shape index: {}]
  %s1 = inlined_call_operand.vmem [shape: bf16[768,256], index: 1, kind: input, shape index: {}]
  %s2 = inlined_call_operand.vmem [shape: f32[1,256], index: 2, kind: input, shape index: {}]
  %s3 = inlined_call_operand.vmem [shape: bf16[768,512], index: 3, kind: input, shape index: {}]
  %s4 = inlined_call_operand.vmem [shape: f32[1,512], index: 4, kind: input, shape index: {}]
  %s5 = inlined_call_operand.vmem [shape: bf16[512,128], index: 5, kind: input, shape index: {}]
  %s6 = inlined_call_operand.vmem [shape: f32[1,128], index: 6, kind: input, shape index: {}]
  %s7 = inlined_call_operand.hbm [shape: f32[16,128], index: 7, kind: output, shape index: {}]
  %s8 = sld [smem:[#allocation0]]
  $region38: #{robot_actor_forward.1} parent=0
    _
  %s10 = ssub.s32 1, %s8
  %s11 = scalar_select 0, %s10, %s8
  $region1: #{robot_actor_forward.1} parent=0
    #allocation2 [shape = 'u8[8192]{0}', space=vmem, size = 0x2000, scoped, tag = 'output window, operand 0, single buffered']
    #allocation3 [shape = 's32[1]{0}', space=sflag, size = 0x4, scoped, tag = 'scoped memory for robot_actor_forward.1']
    %12 = vsyncpa [#allocation3], 0
    // Predicated region
    $region2: #{robot_actor_forward.1} parent=1 // pred_check
      _
    $region3: #{robot_actor_forward.1} parent=1 // pred_check_branch
      %14 = sbr.rel (0) target = $region5
    $region4: #{robot_actor_forward.1} parent=1 // pred_region
      _
    $region5: #{robot_actor_forward.1} parent=1 // pred_fallthru
      _
    // Predicated region
    $region6: #{robot_actor_forward.1} parent=1 // pred_check
      _
    $region7: #{robot_actor_forward.1} parent=1 // pred_check_branch
      %16 = sbr.rel (0) target = $region9
    $region8: #{robot_actor_forward.1} parent=1 // pred_region
      _
    $region9: #{robot_actor_forward.1} parent=1 // pred_fallthru
      _
    // Predicated region
    $region10: #{robot_actor_forward.1} parent=1 // pred_check
      _
    $region11: #{robot_actor_forward.1} parent=1 // pred_check_branch
      %18 = sbr.rel (0) target = $region13
    $region12: #{robot_actor_forward.1} parent=1 // pred_region
      _
    $region13: #{robot_actor_forward.1} parent=1 // pred_fallthru
      _
    // Predicated region
    $region14: #{robot_actor_forward.1} parent=1 // pred_check
      _
    $region15: #{robot_actor_forward.1} parent=1 // pred_check_branch
      %20 = sbr.rel (0) target = $region17
    $region16: #{robot_actor_forward.1} parent=1 // pred_region
      _
    $region17: #{robot_actor_forward.1} parent=1 // pred_fallthru
      _
    // Predicated region
    $region18: #{robot_actor_forward.1} parent=1 // pred_check
      _
    $region19: #{robot_actor_forward.1} parent=1 // pred_check_branch
      %22 = sbr.rel (0) target = $region21
    $region20: #{robot_actor_forward.1} parent=1 // pred_region
      _
    $region21: #{robot_actor_forward.1} parent=1 // pred_fallthru
      _
    // Predicated region
    $region22: #{robot_actor_forward.1} parent=1 // pred_check
      _
    $region23: #{robot_actor_forward.1} parent=1 // pred_check_branch
      %24 = sbr.rel (0) target = $region25
    $region24: #{robot_actor_forward.1} parent=1 // pred_region
      _
    $region25: #{robot_actor_forward.1} parent=1 // pred_fallthru
      _
    // Predicated region
    $region26: #{robot_actor_forward.1} parent=1 // pred_check
      _
    $region27: #{robot_actor_forward.1} parent=1 // pred_check_branch
      %26 = sbr.rel (0) target = $region29
    $region28: #{robot_actor_forward.1} parent=1 // pred_region
      _
    $region29: #{robot_actor_forward.1} parent=1 // pred_fallthru
      _
    %v28 = vld [vmem:[%s0] sm:$0xff]
    %v29 = vld [vmem:[%s0 + $0x8] sm:$0xff]
    %v30 = vld [vmem:[%s0 + $0x10] sm:$0xff]
    %v31 = vld [vmem:[%s0 + $0x18] sm:$0xff]
    %v32 = vld [vmem:[%s0 + $0x20] sm:$0xff]
    %v33 = vld [vmem:[%s0 + $0x28] sm:$0xff]
    %v34 = vld [vmem:[%s0 + $0x30] sm:$0xff]
    %v35 = vld [vmem:[%s0 + $0x38] sm:$0xff]
    %v36 = vld [vmem:[%s0 + $0x40] sm:$0xff]
    %v37 = vld [vmem:[%s0 + $0x48] sm:$0xff]
    %v38 = vld [vmem:[%s0 + $0x50] sm:$0xff]
    %v39 = vld [vmem:[%s0 + $0x58] sm:$0xff]
    %v40 = vld [vmem:[%s0 + $0x60] sm:$0xff]
    %v41 = vld [vmem:[%s0 + $0x68] sm:$0xff]
    %v42 = vld [vmem:[%s0 + $0x70] sm:$0xff]
    %v43 = vld [vmem:[%s0 + $0x78] sm:$0xff]
    %v44 = vld [vmem:[%s0 + $0x80] sm:$0xff]
    %v45 = vld [vmem:[%s0 + $0x88] sm:$0xff]
    %v46 = vld [vmem:[%s1] sm:$0xff]
    %v47 = vld [vmem:[%s1 + $0x8] sm:$0xff]
    %v48 = vld [vmem:[%s1 + $0x10] sm:$0xff]
    %v49 = vld [vmem:[%s1 + $0x18] sm:$0xff]
    %v50 = vld [vmem:[%s1 + $0x20] sm:$0xff]
    %v51 = vld [vmem:[%s1 + $0x28] sm:$0xff]
    %v52 = vld [vmem:[%s1 + $0x30] sm:$0xff]
    %v53 = vld [vmem:[%s1 + $0x38] sm:$0xff]
    %v54 = vld [vmem:[%s1 + $0x40] sm:$0xff]
    %v55 = vld [vmem:[%s1 + $0x48] sm:$0xff]
    %v56 = vld [vmem:[%s1 + $0x50] sm:$0xff]
    %v57 = vld [vmem:[%s1 + $0x58] sm:$0xff]
    %v58 = vld [vmem:[%s1 + $0x60] sm:$0xff]
    %v59 = vld [vmem:[%s1 + $0x68] sm:$0xff]
    %v60 = vld [vmem:[%s1 + $0x70] sm:$0xff]
    %v61 = vld [vmem:[%s1 + $0x78] sm:$0xff]
    %v62 = vld [vmem:[%s1 + $0x80] sm:$0xff]
    %v63 = vld [vmem:[%s1 + $0x88] sm:$0xff]
    %v64 = vld [vmem:[%s1 + $0x90] sm:$0xff]
    %v65 = vld [vmem:[%s1 + $0x98] sm:$0xff]
    %v66 = vld [vmem:[%s1 + $0xa0] sm:$0xff]
    %v67 = vld [vmem:[%s1 + $0xa8] sm:$0xff]
    %v68 = vld [vmem:[%s1 + $0xb0] sm:$0xff]
    %v69 = vld [vmem:[%s1 + $0xb8] sm:$0xff]
    %v70 = vld [vmem:[%s1 + $0xc0] sm:$0xff]
    %v71 = vld [vmem:[%s1 + $0xc8] sm:$0xff]
    %v72 = vld [vmem:[%s1 + $0xd0] sm:$0xff]
    %v73 = vld [vmem:[%s1 + $0xd8] sm:$0xff]
    %v74 = vld [vmem:[%s1 + $0xe0] sm:$0xff]
    %v75 = vld [vmem:[%s1 + $0xe8] sm:$0xff]
    %v76 = vld [vmem:[%s1 + $0xf0] sm:$0xff]
    %v77 = vld [vmem:[%s1 + $0xf8] sm:$0xff]
    %v78 = vld [vmem:[%s1 + $0x100] sm:$0xff]
    %v79 = vld [vmem:[%s1 + $0x108] sm:$0xff]
    %v80 = vld [vmem:[%s1 + $0x110] sm:$0xff]
    %v81 = vld [vmem:[%s1 + $0x118] sm:$0xff]
    %v82 = vld [vmem:[%s1 + $0x120] sm:$0xff]
    %v83 = vld [vmem:[%s1 + $0x128] sm:$0xff]
    %v84 = vld [vmem:[%s1 + $0x130] sm:$0xff]
    %v85 = vld [vmem:[%s1 + $0x138] sm:$0xff]
    %v86 = vld [vmem:[%s1 + $0x140] sm:$0xff]
    %v87 = vld [vmem:[%s1 + $0x148] sm:$0xff]
    %v88 = vld [vmem:[%s1 + $0x150] sm:$0xff]
    %v89 = vld [vmem:[%s1 + $0x158] sm:$0xff]
    %v90 = vld [vmem:[%s1 + $0x160] sm:$0xff]
    %v91 = vld [vmem:[%s1 + $0x168] sm:$0xff]
    %v92 = vld [vmem:[%s1 + $0x170] sm:$0xff]
    %v93 = vld [vmem:[%s1 + $0x178] sm:$0xff]
    %v94 = vld [vmem:[%s1 + $0x180] sm:$0xff]
    %v95 = vld [vmem:[%s1 + $0x188] sm:$0xff]
    %v96 = vld [vmem:[%s1 + $0x190] sm:$0xff]
    %v97 = vld [vmem:[%s1 + $0x198] sm:$0xff]
    %v98 = vld [vmem:[%s1 + $0x1a0] sm:$0xff]
    %v99 = vld [vmem:[%s1 + $0x1a8] sm:$0xff]
    %v100 = vld [vmem:[%s1 + $0x1b0] sm:$0xff]
    %v101 = vld [vmem:[%s1 + $0x1b8] sm:$0xff]
    %v102 = vld [vmem:[%s1 + $0x1c0] sm:$0xff]
    %v103 = vld [vmem:[%s1 + $0x1c8] sm:$0xff]
    %v104 = vld [vmem:[%s1 + $0x1d0] sm:$0xff]
    %v105 = vld [vmem:[%s1 + $0x1d8] sm:$0xff]
    %v106 = vld [vmem:[%s1 + $0x1e0] sm:$0xff]
    %v107 = vld [vmem:[%s1 + $0x1e8] sm:$0xff]
    %v108 = vld [vmem:[%s1 + $0x1f0] sm:$0xff]
    %v109 = vld [vmem:[%s1 + $0x1f8] sm:$0xff]
    %v110 = vld [vmem:[%s1 + $0x200] sm:$0xff]
    %v111 = vld [vmem:[%s1 + $0x208] sm:$0xff]
    %v112 = vld [vmem:[%s1 + $0x210] sm:$0xff]
    %v113 = vld [vmem:[%s1 + $0x218] sm:$0xff]
    %v114 = vld [vmem:[%s1 + $0x220] sm:$0xff]
    %v115 = vld [vmem:[%s1 + $0x228] sm:$0xff]
    %v116 = vld [vmem:[%s1 + $0x230] sm:$0xff]
    %v117 = vld [vmem:[%s1 + $0x238] sm:$0xff]
    %v118 = vld [vmem:[%s1 + $0x240] sm:$0xff]
    %v119 = vld [vmem:[%s1 + $0x248] sm:$0xff]
    %v120 = vld [vmem:[%s1 + $0x250] sm:$0xff]
    %v121 = vld [vmem:[%s1 + $0x258] sm:$0xff]
    %v122 = vld [vmem:[%s1 + $0x260] sm:$0xff]
    %v123 = vld [vmem:[%s1 + $0x268] sm:$0xff]
    %v124 = vld [vmem:[%s1 + $0x270] sm:$0xff]
    %v125 = vld [vmem:[%s1 + $0x278] sm:$0xff]
    %v126 = vld [vmem:[%s1 + $0x280] sm:$0xff]
    %v127 = vld [vmem:[%s1 + $0x288] sm:$0xff]
    %v128 = vld [vmem:[%s1 + $0x290] sm:$0xff]
    %v129 = vld [vmem:[%s1 + $0x298] sm:$0xff]
    %v130 = vld [vmem:[%s1 + $0x2a0] sm:$0xff]
    %v131 = vld [vmem:[%s1 + $0x2a8] sm:$0xff]
    %v132 = vld [vmem:[%s1 + $0x2b0] sm:$0xff]
    %v133 = vld [vmem:[%s1 + $0x2b8] sm:$0xff]
    %v134 = vld [vmem:[%s1 + $0x2c0] sm:$0xff]
    %v135 = vld [vmem:[%s1 + $0x2c8] sm:$0xff]
    %v136 = vld [vmem:[%s1 + $0x2d0] sm:$0xff]
    %v137 = vld [vmem:[%s1 + $0x2d8] sm:$0xff]
    %v138 = vld [vmem:[%s1 + $0x2e0] sm:$0xff]
    %v139 = vld [vmem:[%s1 + $0x2e8] sm:$0xff]
    %v140 = vld [vmem:[%s1 + $0x2f0] sm:$0xff]
    %v141 = vld [vmem:[%s1 + $0x2f8] sm:$0xff]
    %v142 = vld [vmem:[%s2] sm:$0x3]
    %v144 = vlaneseq
    %v145 = vshrl.u32 %v144, 7
    %v146 = vsub.s32 0, %v145
    %v147 = vrot.slane %v142, %v146
    %v148 = vlaneseq
    %v149 = vshrl.u32 %v148, 7
    %v150 = vsub.s32 1, %v149
    %v151 = vrot.slane %v142, %v150
    %v172 = vunpack.c.l.b16 %v28
    %v173 = vunpack.c.h.b16 %v28
    %v174 = vunpack.c.l.b16 %v29
    %v175 = vunpack.c.h.b16 %v29
    %v176 = vunpack.c.l.b16 %v30
    %v177 = vunpack.c.h.b16 %v30
    %v178 = vunpack.c.l.b16 %v31
    %v179 = vunpack.c.h.b16 %v31
    %v180 = vunpack.c.l.b16 %v32
    %v181 = vunpack.c.h.b16 %v32
    %v182 = vunpack.c.l.b16 %v33
    %v183 = vunpack.c.h.b16 %v33
    %v184 = vunpack.c.l.b16 %v34
    %v185 = vunpack.c.h.b16 %v34
    %v186 = vunpack.c.l.b16 %v35
    %v187 = vunpack.c.h.b16 %v35
    %v188 = vunpack.c.l.b16 %v36
    %v189 = vunpack.c.h.b16 %v36
    %v190 = vunpack.c.l.b16 %v37
    %v191 = vunpack.c.h.b16 %v37
    %v192 = vunpack.c.l.b16 %v38
    %v193 = vunpack.c.h.b16 %v38
    %v194 = vunpack.c.l.b16 %v39
    %v195 = vunpack.c.h.b16 %v39
    %v196 = vunpack.c.l.b16 %v40
    %v197 = vunpack.c.h.b16 %v40
    %v198 = vunpack.c.l.b16 %v41
    %v199 = vunpack.c.h.b16 %v41
    %v200 = vunpack.c.l.b16 %v42
    %v201 = vunpack.c.h.b16 %v42
    %v202 = vunpack.c.l.b16 %v43
    %v203 = vunpack.c.h.b16 %v43
    %v204 = vunpack.c.l.b16 %v44
    %v205 = vunpack.c.h.b16 %v44
    %v206 = vunpack.c.l.b16 %v45
    %v207 = vunpack.c.h.b16 %v45
    %v208 = vpack.c.b16 %v178, %v172
    %v209 = vpack.c.b16 %v179, %v173
    %v210 = vpack.c.b16 %v180, %v174
    %v211 = vpack.c.b16 %v181, %v175
    %v212 = vpack.c.b16 %v182, %v176
    %v213 = vpack.c.b16 %v183, %v177
    %v214 = vpack.c.b16 %v190, %v184
    %v215 = vpack.c.b16 %v191, %v185
    %v216 = vpack.c.b16 %v192, %v186
    %v217 = vpack.c.b16 %v193, %v187
    %v218 = vpack.c.b16 %v194, %v188
    %v219 = vpack.c.b16 %v195, %v189
    %v220 = vpack.c.b16 %v202, %v196
    %v221 = vpack.c.b16 %v203, %v197
    %v222 = vpack.c.b16 %v204, %v198
    %v223 = vpack.c.b16 %v205, %v199
    %v224 = vpack.c.b16 %v206, %v200
    %v225 = vpack.c.b16 %v207, %v201
    %v340 = vunpack.c.l.b16 %v46
    %v341 = vunpack.c.h.b16 %v46
    %v342 = vunpack.c.l.b16 %v47
    %v343 = vunpack.c.h.b16 %v47
    %v344 = vunpack.c.l.b16 %v48
    %v345 = vunpack.c.h.b16 %v48
    %v346 = vunpack.c.l.b16 %v49
    %v347 = vunpack.c.h.b16 %v49
    %v348 = vunpack.c.l.b16 %v50
    %v349 = vunpack.c.h.b16 %v50
    %v350 = vunpack.c.l.b16 %v51
    %v351 = vunpack.c.h.b16 %v51
    %v352 = vunpack.c.l.b16 %v52
    %v353 = vunpack.c.h.b16 %v52
    %v354 = vunpack.c.l.b16 %v53
    %v355 = vunpack.c.h.b16 %v53
    %v356 = vunpack.c.l.b16 %v54
    %v357 = vunpack.c.h.b16 %v54
    %v358 = vunpack.c.l.b16 %v55
    %v359 = vunpack.c.h.b16 %v55
    %v360 = vunpack.c.l.b16 %v56
    %v361 = vunpack.c.h.b16 %v56
    %v362 = vunpack.c.l.b16 %v57
    %v363 = vunpack.c.h.b16 %v57
    %v364 = vunpack.c.l.b16 %v58
    %v365 = vunpack.c.h.b16 %v58
    %v366 = vunpack.c.l.b16 %v59
    %v367 = vunpack.c.h.b16 %v59
    %v368 = vunpack.c.l.b16 %v60
    %v369 = vunpack.c.h.b16 %v60
    %v370 = vunpack.c.l.b16 %v61
    %v371 = vunpack.c.h.b16 %v61
    %v372 = vunpack.c.l.b16 %v62
    %v373 = vunpack.c.h.b16 %v62
    %v374 = vunpack.c.l.b16 %v63
    %v375 = vunpack.c.h.b16 %v63
    %v376 = vunpack.c.l.b16 %v64
    %v377 = vunpack.c.h.b16 %v64
    %v378 = vunpack.c.l.b16 %v65
    %v379 = vunpack.c.h.b16 %v65
    %v380 = vunpack.c.l.b16 %v66
    %v381 = vunpack.c.h.b16 %v66
    %v382 = vunpack.c.l.b16 %v67
    %v383 = vunpack.c.h.b16 %v67
    %v384 = vunpack.c.l.b16 %v68
    %v385 = vunpack.c.h.b16 %v68
    %v386 = vunpack.c.l.b16 %v69
    %v387 = vunpack.c.h.b16 %v69
    %v388 = vunpack.c.l.b16 %v70
    %v389 = vunpack.c.h.b16 %v70
    %v390 = vunpack.c.l.b16 %v71
    %v391 = vunpack.c.h.b16 %v71
    %v392 = vunpack.c.l.b16 %v72
    %v393 = vunpack.c.h.b16 %v72
    %v394 = vunpack.c.l.b16 %v73
    %v395 = vunpack.c.h.b16 %v73
    %v396 = vunpack.c.l.b16 %v74
    %v397 = vunpack.c.h.b16 %v74
    %v398 = vunpack.c.l.b16 %v75
    %v399 = vunpack.c.h.b16 %v75
    %v400 = vunpack.c.l.b16 %v76
    %v401 = vunpack.c.h.b16 %v76
    %v402 = vunpack.c.l.b16 %v77
    %v403 = vunpack.c.h.b16 %v77
    %v404 = vunpack.c.l.b16 %v78
    %v405 = vunpack.c.h.b16 %v78
    %v406 = vunpack.c.l.b16 %v79
    %v407 = vunpack.c.h.b16 %v79
    %v408 = vunpack.c.l.b16 %v80
    %v409 = vunpack.c.h.b16 %v80
    %v410 = vunpack.c.l.b16 %v81
    %v411 = vunpack.c.h.b16 %v81
    %v412 = vunpack.c.l.b16 %v82
    %v413 = vunpack.c.h.b16 %v82
    %v414 = vunpack.c.l.b16 %v83
    %v415 = vunpack.c.h.b16 %v83
    %v416 = vunpack.c.l.b16 %v84
    %v417 = vunpack.c.h.b16 %v84
    %v418 = vunpack.c.l.b16 %v85
    %v419 = vunpack.c.h.b16 %v85
    %v420 = vunpack.c.l.b16 %v86
    %v421 = vunpack.c.h.b16 %v86
    %v422 = vunpack.c.l.b16 %v87
    %v423 = vunpack.c.h.b16 %v87
    %v424 = vunpack.c.l.b16 %v88
    %v425 = vunpack.c.h.b16 %v88
    %v426 = vunpack.c.l.b16 %v89
    %v427 = vunpack.c.h.b16 %v89
    %v428 = vunpack.c.l.b16 %v90
    %v429 = vunpack.c.h.b16 %v90
    %v430 = vunpack.c.l.b16 %v91
    %v431 = vunpack.c.h.b16 %v91
    %v432 = vunpack.c.l.b16 %v92
    %v433 = vunpack.c.h.b16 %v92
    %v434 = vunpack.c.l.b16 %v93
    %v435 = vunpack.c.h.b16 %v93
    %v436 = vunpack.c.l.b16 %v94
    %v437 = vunpack.c.h.b16 %v94
    %v438 = vunpack.c.l.b16 %v95
    %v439 = vunpack.c.h.b16 %v95
    %v440 = vunpack.c.l.b16 %v96
    %v441 = vunpack.c.h.b16 %v96
    %v442 = vunpack.c.l.b16 %v97
    %v443 = vunpack.c.h.b16 %v97
    %v444 = vunpack.c.l.b16 %v98
    %v445 = vunpack.c.h.b16 %v98
    %v446 = vunpack.c.l.b16 %v99
    %v447 = vunpack.c.h.b16 %v99
    %v448 = vunpack.c.l.b16 %v100
    %v449 = vunpack.c.h.b16 %v100
    %v450 = vunpack.c.l.b16 %v101
    %v451 = vunpack.c.h.b16 %v101
    %v452 = vunpack.c.l.b16 %v102
    %v453 = vunpack.c.h.b16 %v102
    %v454 = vunpack.c.l.b16 %v103
    %v455 = vunpack.c.h.b16 %v103
    %v456 = vunpack.c.l.b16 %v104
    %v457 = vunpack.c.h.b16 %v104
    %v458 = vunpack.c.l.b16 %v105
    %v459 = vunpack.c.h.b16 %v105
    %v460 = vunpack.c.l.b16 %v106
    %v461 = vunpack.c.h.b16 %v106
    %v462 = vunpack.c.l.b16 %v107
    %v463 = vunpack.c.h.b16 %v107
    %v464 = vunpack.c.l.b16 %v108
    %v465 = vunpack.c.h.b16 %v108
    %v466 = vunpack.c.l.b16 %v109
    %v467 = vunpack.c.h.b16 %v109
    %v468 = vunpack.c.l.b16 %v110
    %v469 = vunpack.c.h.b16 %v110
    %v470 = vunpack.c.l.b16 %v111
    %v471 = vunpack.c.h.b16 %v111
    %v472 = vunpack.c.l.b16 %v112
    %v473 = vunpack.c.h.b16 %v112
    %v474 = vunpack.c.l.b16 %v113
    %v475 = vunpack.c.h.b16 %v113
    %v476 = vunpack.c.l.b16 %v114
    %v477 = vunpack.c.h.b16 %v114
    %v478 = vunpack.c.l.b16 %v115
    %v479 = vunpack.c.h.b16 %v115
    %v480 = vunpack.c.l.b16 %v116
    %v481 = vunpack.c.h.b16 %v116
    %v482 = vunpack.c.l.b16 %v117
    %v483 = vunpack.c.h.b16 %v117
    %v484 = vunpack.c.l.b16 %v118
    %v485 = vunpack.c.h.b16 %v118
    %v486 = vunpack.c.l.b16 %v119
    %v487 = vunpack.c.h.b16 %v119
    %v488 = vunpack.c.l.b16 %v120
    %v489 = vunpack.c.h.b16 %v120
    %v490 = vunpack.c.l.b16 %v121
    %v491 = vunpack.c.h.b16 %v121
    %v492 = vunpack.c.l.b16 %v122
    %v493 = vunpack.c.h.b16 %v122
    %v494 = vunpack.c.l.b16 %v123
    %v495 = vunpack.c.h.b16 %v123
    %v496 = vunpack.c.l.b16 %v124
    %v497 = vunpack.c.h.b16 %v124
    %v498 = vunpack.c.l.b16 %v125
    %v499 = vunpack.c.h.b16 %v125
    %v500 = vunpack.c.l.b16 %v126
    %v501 = vunpack.c.h.b16 %v126
    %v502 = vunpack.c.l.b16 %v127
    %v503 = vunpack.c.h.b16 %v127
    %v504 = vunpack.c.l.b16 %v128
    %v505 = vunpack.c.h.b16 %v128
    %v506 = vunpack.c.l.b16 %v129
    %v507 = vunpack.c.h.b16 %v129
    %v508 = vunpack.c.l.b16 %v130
    %v509 = vunpack.c.h.b16 %v130
    %v510 = vunpack.c.l.b16 %v131
    %v511 = vunpack.c.h.b16 %v131
    %v512 = vunpack.c.l.b16 %v132
    %v513 = vunpack.c.h.b16 %v132
    %v514 = vunpack.c.l.b16 %v133
    %v515 = vunpack.c.h.b16 %v133
    %v516 = vunpack.c.l.b16 %v134
    %v517 = vunpack.c.h.b16 %v134
    %v518 = vunpack.c.l.b16 %v135
    %v519 = vunpack.c.h.b16 %v135
    %v520 = vunpack.c.l.b16 %v136
    %v521 = vunpack.c.h.b16 %v136
    %v522 = vunpack.c.l.b16 %v137
    %v523 = vunpack.c.h.b16 %v137
    %v524 = vunpack.c.l.b16 %v138
    %v525 = vunpack.c.h.b16 %v138
    %v526 = vunpack.c.l.b16 %v139
    %v527 = vunpack.c.h.b16 %v139
    %v528 = vunpack.c.l.b16 %v140
    %v529 = vunpack.c.h.b16 %v140
    %v530 = vunpack.c.l.b16 %v141
    %v531 = vunpack.c.h.b16 %v141
    %v532 = vpack.c.b16 %v342, %v340
    %v533 = vpack.c.b16 %v343, %v341
    %v534 = vpack.c.b16 %v346, %v344
    %v535 = vpack.c.b16 %v347, %v345
    %v536 = vpack.c.b16 %v350, %v348
    %v537 = vpack.c.b16 %v351, %v349
    %v538 = vpack.c.b16 %v354, %v352
    %v539 = vpack.c.b16 %v355, %v353
    %v540 = vpack.c.b16 %v358, %v356
    %v541 = vpack.c.b16 %v359, %v357
    %v542 = vpack.c.b16 %v362, %v360
    %v543 = vpack.c.b16 %v363, %v361
    %v544 = vpack.c.b16 %v366, %v364
    %v545 = vpack.c.b16 %v367, %v365
    %v546 = vpack.c.b16 %v370, %v368
    %v547 = vpack.c.b16 %v371, %v369
    %v548 = vpack.c.b16 %v374, %v372
    %v549 = vpack.c.b16 %v375, %v373
    %v550 = vpack.c.b16 %v378, %v376
    %v551 = vpack.c.b16 %v379, %v377
    %v552 = vpack.c.b16 %v382, %v380
    %v553 = vpack.c.b16 %v383, %v381
    %v554 = vpack.c.b16 %v386, %v384
    %v555 = vpack.c.b16 %v387, %v385
    %v556 = vpack.c.b16 %v390, %v388
    %v557 = vpack.c.b16 %v391, %v389
    %v558 = vpack.c.b16 %v394, %v392
    %v559 = vpack.c.b16 %v395, %v393
    %v560 = vpack.c.b16 %v398, %v396
    %v561 = vpack.c.b16 %v399, %v397
    %v562 = vpack.c.b16 %v402, %v400
    %v563 = vpack.c.b16 %v403, %v401
    %v564 = vpack.c.b16 %v406, %v404
    %v565 = vpack.c.b16 %v407, %v405
    %v566 = vpack.c.b16 %v410, %v408
    %v567 = vpack.c.b16 %v411, %v409
    %v568 = vpack.c.b16 %v414, %v412
    %v569 = vpack.c.b16 %v415, %v413
    %v570 = vpack.c.b16 %v418, %v416
    %v571 = vpack.c.b16 %v419, %v417
    %v572 = vpack.c.b16 %v422, %v420
    %v573 = vpack.c.b16 %v423, %v421
    %v574 = vpack.c.b16 %v426, %v424
    %v575 = vpack.c.b16 %v427, %v425
    %v576 = vpack.c.b16 %v430, %v428
    %v577 = vpack.c.b16 %v431, %v429
    %v578 = vpack.c.b16 %v434, %v432
    %v579 = vpack.c.b16 %v435, %v433
    %v580 = vpack.c.b16 %v438, %v436
    %v581 = vpack.c.b16 %v439, %v437
    %v582 = vpack.c.b16 %v442, %v440
    %v583 = vpack.c.b16 %v443, %v441
    %v584 = vpack.c.b16 %v446, %v444
    %v585 = vpack.c.b16 %v447, %v445
    %v586 = vpack.c.b16 %v450, %v448
    %v587 = vpack.c.b16 %v451, %v449
    %v588 = vpack.c.b16 %v454, %v452
    %v589 = vpack.c.b16 %v455, %v453
    %v590 = vpack.c.b16 %v458, %v456
    %v591 = vpack.c.b16 %v459, %v457
    %v592 = vpack.c.b16 %v462, %v460
    %v593 = vpack.c.b16 %v463, %v461
    %v594 = vpack.c.b16 %v466, %v464
    %v595 = vpack.c.b16 %v467, %v465
    %v596 = vpack.c.b16 %v470, %v468
    %v597 = vpack.c.b16 %v471, %v469
    %v598 = vpack.c.b16 %v474, %v472
    %v599 = vpack.c.b16 %v475, %v473
    %v600 = vpack.c.b16 %v478, %v476
    %v601 = vpack.c.b16 %v479, %v477
    %v602 = vpack.c.b16 %v482, %v480
    %v603 = vpack.c.b16 %v483, %v481
    %v604 = vpack.c.b16 %v486, %v484
    %v605 = vpack.c.b16 %v487, %v485
    %v606 = vpack.c.b16 %v490, %v488
    %v607 = vpack.c.b16 %v491, %v489
    %v608 = vpack.c.b16 %v494, %v492
    %v609 = vpack.c.b16 %v495, %v493
    %v610 = vpack.c.b16 %v498, %v496
    %v611 = vpack.c.b16 %v499, %v497
    %v612 = vpack.c.b16 %v502, %v500
    %v613 = vpack.c.b16 %v503, %v501
    %v614 = vpack.c.b16 %v506, %v504
    %v615 = vpack.c.b16 %v507, %v505
    %v616 = vpack.c.b16 %v510, %v508
    %v617 = vpack.c.b16 %v511, %v509
    %v618 = vpack.c.b16 %v514, %v512
    %v619 = vpack.c.b16 %v515, %v513
    %v620 = vpack.c.b16 %v518, %v516
    %v621 = vpack.c.b16 %v519, %v517
    %v622 = vpack.c.b16 %v522, %v520
    %v623 = vpack.c.b16 %v523, %v521
    %v624 = vpack.c.b16 %v526, %v524
    %v625 = vpack.c.b16 %v527, %v525
    %v626 = vpack.c.b16 %v530, %v528
    %v627 = vpack.c.b16 %v531, %v529
    %724 = vmatprep.subr.bf16.mxu0 %v533
    %725 = vmatpush1.bf16.msra.mxu0 %v532
    %726 = vmatprep.subr.bf16.mxu0 %v535
    %727 = vmatpush1.bf16.msra.mxu0 %v534
    %728 = vmatprep.subr.bf16.mxu0 %v537
    %729 = vmatpush1.bf16.msra.mxu0 %v536
    %730 = vmatprep.subr.bf16.mxu0 %v539
    %731 = vmatpush1.bf16.msra.mxu0 %v538
    %732 = vmatprep.subr.bf16.mxu0 %v541
    %733 = vmatpush1.bf16.msra.mxu0 %v540
    %734 = vmatprep.subr.bf16.mxu0 %v543
    %735 = vmatpush1.bf16.msra.mxu0 %v542
    %736 = vmatprep.subr.bf16.mxu0 %v545
    %737 = vmatpush1.bf16.msra.mxu0 %v544
    %738 = vmatprep.subr.bf16.mxu0 %v547
    %739 = vmatpush1.bf16.msra.mxu0 %v546
    %740 = vmatprep.subr.bf16.mxu0 %v549
    %741 = vmatpush1.bf16.msra.mxu0 %v548
    %742 = vmatprep.subr.bf16.mxu0 %v551
    %743 = vmatpush1.bf16.msra.mxu0 %v550
    %744 = vmatprep.subr.bf16.mxu0 %v553
    %745 = vmatpush1.bf16.msra.mxu0 %v552
    %746 = vmatprep.subr.bf16.mxu0 %v555
    %747 = vmatpush1.bf16.msra.mxu0 %v554
    %748 = vmatprep.subr.bf16.mxu0 %v557
    %749 = vmatpush1.bf16.msra.mxu0 %v556
    %750 = vmatprep.subr.bf16.mxu0 %v559
    %751 = vmatpush1.bf16.msra.mxu0 %v558
    %752 = vmatprep.subr.bf16.mxu0 %v561
    %753 = vmatpush1.bf16.msra.mxu0 %v560
    %754 = vmatprep.subr.bf16.mxu0 %v563
    %755 = vmatpush1.bf16.msra.mxu0 %v562
    %756 = vmatprep.mubr.bf16.mxu0 %v209
    %757 = vmatmul.mubr.bf16.gmra.mrb[0].mxu0 %v208
    %v758 = vpop.f32.mrb[0].mxu0
    %v759 = vadd.f32 %v147, %v758
    %v760 = vpop.f32.mrb[0].mxu0
    %v761 = vadd.f32 %v151, %v760
    %v762 = vpop.f32.mrb[0].mxu0
    %v763 = vadd.f32 %v147, %v762
    %v764 = vpop.f32.mrb[0].mxu0
    %v765 = vadd.f32 %v151, %v764
    %766 = vmatprep.mubr.bf16.mxu0 %v215
    %767 = vmatmul.mubr.bf16.gmra.mrb[0].mxu0 %v214
    %v768 = vpop.f32.mrb[0].mxu0
    %v769 = vadd.f32 %v147, %v768
    %v770 = vpop.f32.mrb[0].mxu0
    %v771 = vadd.f32 %v151, %v770
    %v772 = vpop.f32.mrb[0].mxu0
    %v773 = vadd.f32 %v147, %v772
    %v774 = vpop.f32.mrb[0].mxu0
    %v775 = vadd.f32 %v151, %v774
    %776 = vmatprep.mubr.bf16.mxu0 %v221
    %777 = vmatmul.mubr.bf16.gmra.mrb[0].mxu0 %v220
    %v778 = vpop.f32.mrb[0].mxu0
    %v779 = vadd.f32 %v147, %v778
    %v780 = vpop.f32.mrb[0].mxu0
    %v781 = vadd.f32 %v151, %v780
    %v782 = vpop.f32.mrb[0].mxu0
    %v783 = vadd.f32 %v147, %v782
    %v784 = vpop.f32.mrb[0].mxu0
    %v785 = vadd.f32 %v151, %v784
    %786 = vdwg.mxu0
    %787 = vmatprep.subr.bf16.mxu0 %v565
    %788 = vmatpush1.bf16.msra.mxu0 %v564
    %789 = vmatprep.subr.bf16.mxu0 %v567
    %790 = vmatpush1.bf16.msra.mxu0 %v566
    %791 = vmatprep.subr.bf16.mxu0 %v569
    %792 = vmatpush1.bf16.msra.mxu0 %v568
    %793 = vmatprep.subr.bf16.mxu0 %v571
    %794 = vmatpush1.bf16.msra.mxu0 %v570
    %795 = vmatprep.subr.bf16.mxu0 %v573
    %796 = vmatpush1.bf16.msra.mxu0 %v572
    %797 = vmatprep.subr.bf16.mxu0 %v575
    %798 = vmatpush1.bf16.msra.mxu0 %v574
    %799 = vmatprep.subr.bf16.mxu0 %v577
    %800 = vmatpush1.bf16.msra.mxu0 %v576
    %801 = vmatprep.subr.bf16.mxu0 %v579
    %802 = vmatpush1.bf16.msra.mxu0 %v578
    %803 = vmatprep.subr.bf16.mxu0 %v581
    %804 = vmatpush1.bf16.msra.mxu0 %v580
    %805 = vmatprep.subr.bf16.mxu0 %v583
    %806 = vmatpush1.bf16.msra.mxu0 %v582
    %807 = vmatprep.subr.bf16.mxu0 %v585
    %808 = vmatpush1.bf16.msra.mxu0 %v584
    %809 = vmatprep.subr.bf16.mxu0 %v587
    %810 = vmatpush1.bf16.msra.mxu0 %v586
    %811 = vmatprep.subr.bf16.mxu0 %v589
    %812 = vmatpush1.bf16.msra.mxu0 %v588
    %813 = vmatprep.subr.bf16.mxu0 %v591
    %814 = vmatpush1.bf16.msra.mxu0 %v590
    %815 = vmatprep.subr.bf16.mxu0 %v593
    %816 = vmatpush1.bf16.msra.mxu0 %v592
    %817 = vmatprep.subr.bf16.mxu0 %v595
    %818 = vmatpush1.bf16.msra.mxu0 %v594
    %819 = vmatprep.mubr.bf16.mxu0 %v211
    %820 = vmatmul.mubr.bf16.gmra.mrb[0].mxu0 %v210
    %v821 = vpop.f32.mrb[0].mxu0
    %v822 = vadd.f32 %v759, %v821
    %v823 = vpop.f32.mrb[0].mxu0
    %v824 = vadd.f32 %v761, %v823
    %v825 = vpop.f32.mrb[0].mxu0
    %v826 = vadd.f32 %v763, %v825
    %v827 = vpop.f32.mrb[0].mxu0
    %v828 = vadd.f32 %v765, %v827
    %829 = vmatprep.mubr.bf16.mxu0 %v217
    %830 = vmatmul.mubr.bf16.gmra.mrb[0].mxu0 %v216
    %v831 = vpop.f32.mrb[0].mxu0
    %v832 = vadd.f32 %v769, %v831
    %v833 = vpop.f32.mrb[0].mxu0
    %v834 = vadd.f32 %v771, %v833
    %v835 = vpop.f32.mrb[0].mxu0
    %v836 = vadd.f32 %v773, %v835
    %v837 = vpop.f32.mrb[0].mxu0
    %v838 = vadd.f32 %v775, %v837
    %839 = vmatprep.mubr.bf16.mxu0 %v223
    %840 = vmatmul.mubr.bf16.gmra.mrb[0].mxu0 %v222
    %v841 = vpop.f32.mrb[0].mxu0
    %v842 = vadd.f32 %v779, %v841
    %v843 = vpop.f32.mrb[0].mxu0
    %v844 = vadd.f32 %v781, %v843
    %v845 = vpop.f32.mrb[0].mxu0
    %v846 = vadd.f32 %v783, %v845
    %v847 = vpop.f32.mrb[0].mxu0
    %v848 = vadd.f32 %v785, %v847
    %849 = vdwg.mxu0
    %850 = vmatprep.subr.bf16.mxu0 %v597
    %851 = vmatpush1.bf16.msra.mxu0 %v596
    %852 = vmatprep.subr.bf16.mxu0 %v599
    %853 = vmatpush1.bf16.msra.mxu0 %v598
    %854 = vmatprep.subr.bf16.mxu0 %v601
    %855 = vmatpush1.bf16.msra.mxu0 %v600
    %856 = vmatprep.subr.bf16.mxu0 %v603
    %857 = vmatpush1.bf16.msra.mxu0 %v602
    %858 = vmatprep.subr.bf16.mxu0 %v605
    %859 = vmatpush1.bf16.msra.mxu0 %v604
    %860 = vmatprep.subr.bf16.mxu0 %v607
    %861 = vmatpush1.bf16.msra.mxu0 %v606
    %862 = vmatprep.subr.bf16.mxu0 %v609
    %863 = vmatpush1.bf16.msra.mxu0 %v608
    %864 = vmatprep.subr.bf16.mxu0 %v611
    %865 = vmatpush1.bf16.msra.mxu0 %v610
    %866 = vmatprep.subr.bf16.mxu0 %v613
    %867 = vmatpush1.bf16.msra.mxu0 %v612
    %868 = vmatprep.subr.bf16.mxu0 %v615
    %869 = vmatpush1.bf16.msra.mxu0 %v614
    %870 = vmatprep.subr.bf16.mxu0 %v617
    %871 = vmatpush1.bf16.msra.mxu0 %v616
    %872 = vmatprep.subr.bf16.mxu0 %v619
    %873 = vmatpush1.bf16.msra.mxu0 %v618
    %874 = vmatprep.subr.bf16.mxu0 %v621
    %875 = vmatpush1.bf16.msra.mxu0 %v620
    %876 = vmatprep.subr.bf16.mxu0 %v623
    %877 = vmatpush1.bf16.msra.mxu0 %v622
    %878 = vmatprep.subr.bf16.mxu0 %v625
    %879 = vmatpush1.bf16.msra.mxu0 %v624
    %880 = vmatprep.subr.bf16.mxu0 %v627
    %881 = vmatpush1.bf16.msra.mxu0 %v626
    %882 = vmatprep.mubr.bf16.mxu0 %v213
    %883 = vmatmul.mubr.bf16.gmra.mrb[0].mxu0 %v212
    %v884 = vpop.f32.mrb[0].mxu0
    %v885 = vadd.f32 %v822, %v884
    %v886 = vpop.f32.mrb[0].mxu0
    %v887 = vadd.f32 %v824, %v886
    %v888 = vpop.f32.mrb[0].mxu0
    %v889 = vadd.f32 %v826, %v888
    %v890 = vpop.f32.mrb[0].mxu0
    %v891 = vadd.f32 %v828, %v890
    %892 = vmatprep.mubr.bf16.mxu0 %v219
    %893 = vmatmul.mubr.bf16.gmra.mrb[0].mxu0 %v218
    %v894 = vpop.f32.mrb[0].mxu0
    %v895 = vadd.f32 %v832, %v894
    %v896 = vpop.f32.mrb[0].mxu0
    %v897 = vadd.f32 %v834, %v896
    %v898 = vpop.f32.mrb[0].mxu0
    %v899 = vadd.f32 %v836, %v898
    %v900 = vpop.f32.mrb[0].mxu0
    %v901 = vadd.f32 %v838, %v900
    %902 = vmatprep.mubr.bf16.mxu0 %v225
    %903 = vmatmul.mubr.bf16.gmra.mrb[0].mxu0 %v224
    %v904 = vpop.f32.mrb[0].mxu0
    %v905 = vadd.f32 %v842, %v904
    %v906 = vpop.f32.mrb[0].mxu0
    %v907 = vadd.f32 %v844, %v906
    %v908 = vpop.f32.mrb[0].mxu0
    %v909 = vadd.f32 %v846, %v908
    %v910 = vpop.f32.mrb[0].mxu0
    %v911 = vadd.f32 %v848, %v910
    %912 = vdwg.mxu0
    %v913 = vpack.c.bf16 %v889, %v885
    %v914 = vpack.c.bf16 %v891, %v887
    %v915 = vpack.c.bf16 %v899, %v895
    %v916 = vpack.c.bf16 %v901, %v897
    %v917 = vpack.c.bf16 %v909, %v905
    %v918 = vpack.c.bf16 %v911, %v907
    %v919 = vld [vmem:[%s3] sm:$0xff]
    %v920 = vld [vmem:[%s3 + $0x8] sm:$0xff]
    %v921 = vld [vmem:[%s3 + $0x10] sm:$0xff]
    %v922 = vld [vmem:[%s3 + $0x18] sm:$0xff]
    %v923 = vld [vmem:[%s3 + $0x20] sm:$0xff]
    %v924 = vld [vmem:[%s3 + $0x28] sm:$0xff]
    %v925 = vld [vmem:[%s3 + $0x30] sm:$0xff]
    %v926 = vld [vmem:[%s3 + $0x38] sm:$0xff]
    %v927 = vld [vmem:[%s3 + $0x40] sm:$0xff]
    %v928 = vld [vmem:[%s3 + $0x48] sm:$0xff]
    %v929 = vld [vmem:[%s3 + $0x50] sm:$0xff]
    %v930 = vld [vmem:[%s3 + $0x58] sm:$0xff]
    %v931 = vld [vmem:[%s3 + $0x60] sm:$0xff]
    %v932 = vld [vmem:[%s3 + $0x68] sm:$0xff]
    %v933 = vld [vmem:[%s3 + $0x70] sm:$0xff]
    %v934 = vld [vmem:[%s3 + $0x78] sm:$0xff]
    %v935 = vld [vmem:[%s3 + $0x80] sm:$0xff]
    %v936 = vld [vmem:[%s3 + $0x88] sm:$0xff]
    %v937 = vld [vmem:[%s3 + $0x90] sm:$0xff]
    %v938 = vld [vmem:[%s3 + $0x98] sm:$0xff]
    %v939 = vld [vmem:[%s3 + $0xa0] sm:$0xff]
    %v940 = vld [vmem:[%s3 + $0xa8] sm:$0xff]
    %v941 = vld [vmem:[%s3 + $0xb0] sm:$0xff]
    %v942 = vld [vmem:[%s3 + $0xb8] sm:$0xff]
    %v943 = vld [vmem:[%s3 + $0xc0] sm:$0xff]
    %v944 = vld [vmem:[%s3 + $0xc8] sm:$0xff]
    %v945 = vld [vmem:[%s3 + $0xd0] sm:$0xff]
    %v946 = vld [vmem:[%s3 + $0xd8] sm:$0xff]
    %v947 = vld [vmem:[%s3 + $0xe0] sm:$0xff]
    %v948 = vld [vmem:[%s3 + $0xe8] sm:$0xff]
    %v949 = vld [vmem:[%s3 + $0xf0] sm:$0xff]
    %v950 = vld [vmem:[%s3 + $0xf8] sm:$0xff]
    %v951 = vld [vmem:[%s3 + $0x100] sm:$0xff]
    %v952 = vld [vmem:[%s3 + $0x108] sm:$0xff]
    %v953 = vld [vmem:[%s3 + $0x110] sm:$0xff]
    %v954 = vld [vmem:[%s3 + $0x118] sm:$0xff]
    %v955 = vld [vmem:[%s3 + $0x120] sm:$0xff]
    %v956 = vld [vmem:[%s3 + $0x128] sm:$0xff]
    %v957 = vld [vmem:[%s3 + $0x130] sm:$0xff]
    %v958 = vld [vmem:[%s3 + $0x138] sm:$0xff]
    %v959 = vld [vmem:[%s3 + $0x140] sm:$0xff]
    %v960 = vld [vmem:[%s3 + $0x148] sm:$0xff]
    %v961 = vld [vmem:[%s3 + $0x150] sm:$0xff]
    %v962 = vld [vmem:[%s3 + $0x158] sm:$0xff]
    %v963 = vld [vmem:[%s3 + $0x160] sm:$0xff]
    %v964 = vld [vmem:[%s3 + $0x168] sm:$0xff]
    %v965 = vld [vmem:[%s3 + $0x170] sm:$0xff]
    %v966 = vld [vmem:[%s3 + $0x178] sm:$0xff]
    %v967 = vld [vmem:[%s3 + $0x180] sm:$0xff]
    %v968 = vld [vmem:[%s3 + $0x188] sm:$0xff]
    %v969 = vld [vmem:[%s3 + $0x190] sm:$0xff]
    %v970 = vld [vmem:[%s3 + $0x198] sm:$0xff]
    %v971 = vld [vmem:[%s3 + $0x1a0] sm:$0xff]
    %v972 = vld [vmem:[%s3 + $0x1a8] sm:$0xff]
    %v973 = vld [vmem:[%s3 + $0x1b0] sm:$0xff]
    %v974 = vld [vmem:[%s3 + $0x1b8] sm:$0xff]
    %v975 = vld [vmem:[%s3 + $0x1c0] sm:$0xff]
    %v976 = vld [vmem:[%s3 + $0x1c8] sm:$0xff]
    %v977 = vld [vmem:[%s3 + $0x1d0] sm:$0xff]
    %v978 = vld [vmem:[%s3 + $0x1d8] sm:$0xff]
    %v979 = vld [vmem:[%s3 + $0x1e0] sm:$0xff]
    %v980 = vld [vmem:[%s3 + $0x1e8] sm:$0xff]
    %v981 = vld [vmem:[%s3 + $0x1f0] sm:$0xff]
    %v982 = vld [vmem:[%s3 + $0x1f8] sm:$0xff]
    %v983 = vld [vmem:[%s3 + $0x200] sm:$0xff]
    %v984 = vld [vmem:[%s3 + $0x208] sm:$0xff]
    %v985 = vld [vmem:[%s3 + $0x210] sm:$0xff]
    %v986 = vld [vmem:[%s3 + $0x218] sm:$0xff]
    %v987 = vld [vmem:[%s3 + $0x220] sm:$0xff]
    %v988 = vld [vmem:[%s3 + $0x228] sm:$0xff]
    %v989 = vld [vmem:[%s3 + $0x230] sm:$0xff]
    %v990 = vld [vmem:[%s3 + $0x238] sm:$0xff]
    %v991 = vld [vmem:[%s3 + $0x240] sm:$0xff]
    %v992 = vld [vmem:[%s3 + $0x248] sm:$0xff]
    %v993 = vld [vmem:[%s3 + $0x250] sm:$0xff]
    %v994 = vld [vmem:[%s3 + $0x258] sm:$0xff]
    %v995 = vld [vmem:[%s3 + $0x260] sm:$0xff]
    %v996 = vld [vmem:[%s3 + $0x268] sm:$0xff]
    %v997 = vld [vmem:[%s3 + $0x270] sm:$0xff]
    %v998 = vld [vmem:[%s3 + $0x278] sm:$0xff]
    %v999 = vld [vmem:[%s3 + $0x280] sm:$0xff]
    %v1000 = vld [vmem:[%s3 + $0x288] sm:$0xff]
    %v1001 = vld [vmem:[%s3 + $0x290] sm:$0xff]
    %v1002 = vld [vmem:[%s3 + $0x298] sm:$0xff]
    %v1003 = vld [vmem:[%s3 + $0x2a0] sm:$0xff]
    %v1004 = vld [vmem:[%s3 + $0x2a8] sm:$0xff]
    %v1005 = vld [vmem:[%s3 + $0x2b0] sm:$0xff]
    %v1006 = vld [vmem:[%s3 + $0x2b8] sm:$0xff]
    %v1007 = vld [vmem:[%s3 + $0x2c0] sm:$0xff]
    %v1008 = vld [vmem:[%s3 + $0x2c8] sm:$0xff]
    %v1009 = vld [vmem:[%s3 + $0x2d0] sm:$0xff]
    %v1010 = vld [vmem:[%s3 + $0x2d8] sm:$0xff]
    %v1011 = vld [vmem:[%s3 + $0x2e0] sm:$0xff]
    %v1012 = vld [vmem:[%s3 + $0x2e8] sm:$0xff]
    %v1013 = vld [vmem:[%s3 + $0x2f0] sm:$0xff]
    %v1014 = vld [vmem:[%s3 + $0x2f8] sm:$0xff]
    %v1015 = vld [vmem:[%s3 + $0x300] sm:$0xff]
    %v1016 = vld [vmem:[%s3 + $0x308] sm:$0xff]
    %v1017 = vld [vmem:[%s3 + $0x310] sm:$0xff]
    %v1018 = vld [vmem:[%s3 + $0x318] sm:$0xff]
    %v1019 = vld [vmem:[%s3 + $0x320] sm:$0xff]
    %v1020 = vld [vmem:[%s3 + $0x328] sm:$0xff]
    %v1021 = vld [vmem:[%s3 + $0x330] sm:$0xff]
    %v1022 = vld [vmem:[%s3 + $0x338] sm:$0xff]
    %v1023 = vld [vmem:[%s3 + $0x340] sm:$0xff]
    %v1024 = vld [vmem:[%s3 + $0x348] sm:$0xff]
    %v1025 = vld [vmem:[%s3 + $0x350] sm:$0xff]
    %v1026 = vld [vmem:[%s3 + $0x358] sm:$0xff]
    %v1027 = vld [vmem:[%s3 + $0x360] sm:$0xff]
    %v1028 = vld [vmem:[%s3 + $0x368] sm:$0xff]
    %v1029 = vld [vmem:[%s3 + $0x370] sm:$0xff]
    %v1030 = vld [vmem:[%s3 + $0x378] sm:$0xff]
    %v1031 = vld [vmem:[%s3 + $0x380] sm:$0xff]
    %v1032 = vld [vmem:[%s3 + $0x388] sm:$0xff]
    %v1033 = vld [vmem:[%s3 + $0x390] sm:$0xff]
    %v1034 = vld [vmem:[%s3 + $0x398] sm:$0xff]
    %v1035 = vld [vmem:[%s3 + $0x3a0] sm:$0xff]
    %v1036 = vld [vmem:[%s3 + $0x3a8] sm:$0xff]
    %v1037 = vld [vmem:[%s3 + $0x3b0] sm:$0xff]
    %v1038 = vld [vmem:[%s3 + $0x3b8] sm:$0xff]
    %v1039 = vld [vmem:[%s3 + $0x3c0] sm:$0xff]
    %v1040 = vld [vmem:[%s3 + $0x3c8] sm:$0xff]
    %v1041 = vld [vmem:[%s3 + $0x3d0] sm:$0xff]
    %v1042 = vld [vmem:[%s3 + $0x3d8] sm:$0xff]
    %v1043 = vld [vmem:[%s3 + $0x3e0] sm:$0xff]
    %v1044 = vld [vmem:[%s3 + $0x3e8] sm:$0xff]
    %v1045 = vld [vmem:[%s3 + $0x3f0] sm:$0xff]
    %v1046 = vld [vmem:[%s3 + $0x3f8] sm:$0xff]
    %v1111 = vunpack.c.l.b16 %v983
    %v1112 = vunpack.c.h.b16 %v983
    %v1113 = vunpack.c.l.b16 %v984
    %v1114 = vunpack.c.h.b16 %v984
    %v1115 = vunpack.c.l.b16 %v985
    %v1116 = vunpack.c.h.b16 %v985
    %v1117 = vunpack.c.l.b16 %v986
    %v1118 = vunpack.c.h.b16 %v986
    %v1119 = vunpack.c.l.b16 %v987
    %v1120 = vunpack.c.h.b16 %v987
    %v1121 = vunpack.c.l.b16 %v988
    %v1122 = vunpack.c.h.b16 %v988
    %v1123 = vunpack.c.l.b16 %v989
    %v1124 = vunpack.c.h.b16 %v989
    %v1125 = vunpack.c.l.b16 %v990
    %v1126 = vunpack.c.h.b16 %v990
    %v1127 = vunpack.c.l.b16 %v991
    %v1128 = vunpack.c.h.b16 %v991
    %v1129 = vunpack.c.l.b16 %v992
    %v1130 = vunpack.c.h.b16 %v992
    %v1131 = vunpack.c.l.b16 %v993
    %v1132 = vunpack.c.h.b16 %v993
    %v1133 = vunpack.c.l.b16 %v994
    %v1134 = vunpack.c.h.b16 %v994
    %v1135 = vunpack.c.l.b16 %v995
    %v1136 = vunpack.c.h.b16 %v995
    %v1137 = vunpack.c.l.b16 %v996
    %v1138 = vunpack.c.h.b16 %v996
    %v1139 = vunpack.c.l.b16 %v997
    %v1140 = vunpack.c.h.b16 %v997
    %v1141 = vunpack.c.l.b16 %v998
    %v1142 = vunpack.c.h.b16 %v998
    %v1143 = vunpack.c.l.b16 %v999
    %v1144 = vunpack.c.h.b16 %v999
    %v1145 = vunpack.c.l.b16 %v1000
    %v1146 = vunpack.c.h.b16 %v1000
    %v1147 = vunpack.c.l.b16 %v1001
    %v1148 = vunpack.c.h.b16 %v1001
    %v1149 = vunpack.c.l.b16 %v1002
    %v1150 = vunpack.c.h.b16 %v1002
    %v1151 = vunpack.c.l.b16 %v1003
    %v1152 = vunpack.c.h.b16 %v1003
    %v1153 = vunpack.c.l.b16 %v1004
    %v1154 = vunpack.c.h.b16 %v1004
    %v1155 = vunpack.c.l.b16 %v1005
    %v1156 = vunpack.c.h.b16 %v1005
    %v1157 = vunpack.c.l.b16 %v1006
    %v1158 = vunpack.c.h.b16 %v1006
    %v1159 = vunpack.c.l.b16 %v1007
    %v1160 = vunpack.c.h.b16 %v1007
    %v1161 = vunpack.c.l.b16 %v1008
    %v1162 = vunpack.c.h.b16 %v1008
    %v1163 = vunpack.c.l.b16 %v1009
    %v1164 = vunpack.c.h.b16 %v1009
    %v1165 = vunpack.c.l.b16 %v1010
    %v1166 = vunpack.c.h.b16 %v1010
    %v1167 = vunpack.c.l.b16 %v1011
    %v1168 = vunpack.c.h.b16 %v1011
    %v1169 = vunpack.c.l.b16 %v1012
    %v1170 = vunpack.c.h.b16 %v1012
    %v1171 = vunpack.c.l.b16 %v1013
    %v1172 = vunpack.c.h.b16 %v1013
    %v1173 = vunpack.c.l.b16 %v1014
    %v1174 = vunpack.c.h.b16 %v1014
    %v1175 = vunpack.c.l.b16 %v1015
    %v1176 = vunpack.c.h.b16 %v1015
    %v1177 = vunpack.c.l.b16 %v1016
    %v1178 = vunpack.c.h.b16 %v1016
    %v1179 = vunpack.c.l.b16 %v1017
    %v1180 = vunpack.c.h.b16 %v1017
    %v1181 = vunpack.c.l.b16 %v1018
    %v1182 = vunpack.c.h.b16 %v1018
    %v1183 = vunpack.c.l.b16 %v1019
    %v1184 = vunpack.c.h.b16 %v1019
    %v1185 = vunpack.c.l.b16 %v1020
    %v1186 = vunpack.c.h.b16 %v1020
    %v1187 = vunpack.c.l.b16 %v1021
    %v1188 = vunpack.c.h.b16 %v1021
    %v1189 = vunpack.c.l.b16 %v1022
    %v1190 = vunpack.c.h.b16 %v1022
    %v1191 = vunpack.c.l.b16 %v1023
    %v1192 = vunpack.c.h.b16 %v1023
    %v1193 = vunpack.c.l.b16 %v1024
    %v1194 = vunpack.c.h.b16 %v1024
    %v1195 = vunpack.c.l.b16 %v1025
    %v1196 = vunpack.c.h.b16 %v1025
    %v1197 = vunpack.c.l.b16 %v1026
    %v1198 = vunpack.c.h.b16 %v1026
    %v1199 = vunpack.c.l.b16 %v1027
    %v1200 = vunpack.c.h.b16 %v1027
    %v1201 = vunpack.c.l.b16 %v1028
    %v1202 = vunpack.c.h.b16 %v1028
    %v1203 = vunpack.c.l.b16 %v1029
    %v1204 = vunpack.c.h.b16 %v1029
    %v1205 = vunpack.c.l.b16 %v1030
    %v1206 = vunpack.c.h.b16 %v1030
    %v1207 = vunpack.c.l.b16 %v1031
    %v1208 = vunpack.c.h.b16 %v1031
    %v1209 = vunpack.c.l.b16 %v1032
    %v1210 = vunpack.c.h.b16 %v1032
    %v1211 = vunpack.c.l.b16 %v1033
    %v1212 = vunpack.c.h.b16 %v1033
    %v1213 = vunpack.c.l.b16 %v1034
    %v1214 = vunpack.c.h.b16 %v1034
    %v1215 = vunpack.c.l.b16 %v1035
    %v1216 = vunpack.c.h.b16 %v1035
    %v1217 = vunpack.c.l.b16 %v1036
    %v1218 = vunpack.c.h.b16 %v1036
    %v1219 = vunpack.c.l.b16 %v1037
    %v1220 = vunpack.c.h.b16 %v1037
    %v1221 = vunpack.c.l.b16 %v1038
    %v1222 = vunpack.c.h.b16 %v1038
    %v1223 = vunpack.c.l.b16 %v1039
    %v1224 = vunpack.c.h.b16 %v1039
    %v1225 = vunpack.c.l.b16 %v1040
    %v1226 = vunpack.c.h.b16 %v1040
    %v1227 = vunpack.c.l.b16 %v1041
    %v1228 = vunpack.c.h.b16 %v1041
    %v1229 = vunpack.c.l.b16 %v1042
    %v1230 = vunpack.c.h.b16 %v1042
    %v1231 = vunpack.c.l.b16 %v1043
    %v1232 = vunpack.c.h.b16 %v1043
    %v1233 = vunpack.c.l.b16 %v1044
    %v1234 = vunpack.c.h.b16 %v1044
    %v1235 = vunpack.c.l.b16 %v1045
    %v1236 = vunpack.c.h.b16 %v1045
    %v1237 = vunpack.c.l.b16 %v1046
    %v1238 = vunpack.c.h.b16 %v1046
    %v1239 = vpack.c.b16 %v1115, %v1111
    %v1240 = vpack.c.b16 %v1116, %v1112
    %v1241 = vpack.c.b16 %v1117, %v1113
    %v1242 = vpack.c.b16 %v1118, %v1114
    %v1243 = vpack.c.b16 %v1123, %v1119
    %v1244 = vpack.c.b16 %v1124, %v1120
    %v1245 = vpack.c.b16 %v1125, %v1121
    %v1246 = vpack.c.b16 %v1126, %v1122
    %v1247 = vpack.c.b16 %v1131, %v1127
    %v1248 = vpack.c.b16 %v1132, %v1128
    %v1249 = vpack.c.b16 %v1133, %v1129
    %v1250 = vpack.c.b16 %v1134, %v1130
    %v1251 = vpack.c.b16 %v1139, %v1135
    %v1252 = vpack.c.b16 %v1140, %v1136
    %v1253 = vpack.c.b16 %v1141, %v1137
    %v1254 = vpack.c.b16 %v1142, %v1138
    %v1255 = vpack.c.b16 %v1147, %v1143
    %v1256 = vpack.c.b16 %v1148, %v1144
    %v1257 = vpack.c.b16 %v1149, %v1145
    %v1258 = vpack.c.b16 %v1150, %v1146
    %v1259 = vpack.c.b16 %v1155, %v1151
    %v1260 = vpack.c.b16 %v1156, %v1152
    %v1261 = vpack.c.b16 %v1157, %v1153
    %v1262 = vpack.c.b16 %v1158, %v1154
    %v1263 = vpack.c.b16 %v1163, %v1159
    %v1264 = vpack.c.b16 %v1164, %v1160
    %v1265 = vpack.c.b16 %v1165, %v1161
    %v1266 = vpack.c.b16 %v1166, %v1162
    %v1267 = vpack.c.b16 %v1171, %v1167
    %v1268 = vpack.c.b16 %v1172, %v1168
    %v1269 = vpack.c.b16 %v1173, %v1169
    %v1270 = vpack.c.b16 %v1174, %v1170
    %v1271 = vpack.c.b16 %v1179, %v1175
    %v1272 = vpack.c.b16 %v1180, %v1176
    %v1273 = vpack.c.b16 %v1181, %v1177
    %v1274 = vpack.c.b16 %v1182, %v1178
    %v1275 = vpack.c.b16 %v1187, %v1183
    %v1276 = vpack.c.b16 %v1188, %v1184
    %v1277 = vpack.c.b16 %v1189, %v1185
    %v1278 = vpack.c.b16 %v1190, %v1186
    %v1279 = vpack.c.b16 %v1195, %v1191
    %v1280 = vpack.c.b16 %v1196, %v1192
    %v1281 = vpack.c.b16 %v1197, %v1193
    %v1282 = vpack.c.b16 %v1198, %v1194
    %v1283 = vpack.c.b16 %v1203, %v1199
    %v1284 = vpack.c.b16 %v1204, %v1200
    %v1285 = vpack.c.b16 %v1205, %v1201
    %v1286 = vpack.c.b16 %v1206, %v1202
    %v1287 = vpack.c.b16 %v1211, %v1207
    %v1288 = vpack.c.b16 %v1212, %v1208
    %v1289 = vpack.c.b16 %v1213, %v1209
    %v1290 = vpack.c.b16 %v1214, %v1210
    %v1291 = vpack.c.b16 %v1219, %v1215
    %v1292 = vpack.c.b16 %v1220, %v1216
    %v1293 = vpack.c.b16 %v1221, %v1217
    %v1294 = vpack.c.b16 %v1222, %v1218
    %v1295 = vpack.c.b16 %v1227, %v1223
    %v1296 = vpack.c.b16 %v1228, %v1224
    %v1297 = vpack.c.b16 %v1229, %v1225
    %v1298 = vpack.c.b16 %v1230, %v1226
    %v1299 = vpack.c.b16 %v1235, %v1231
    %v1300 = vpack.c.b16 %v1236, %v1232
    %v1301 = vpack.c.b16 %v1237, %v1233
    %v1302 = vpack.c.b16 %v1238, %v1234
    %1367 = vmatprep.subr.bf16.mxu0 %v1240
    %1368 = vmatpush1.bf16.msra.mxu0 %v1239
    %1369 = vmatprep.subr.bf16.mxu0 %v1244
    %1370 = vmatpush1.bf16.msra.mxu0 %v1243
    %1371 = vmatprep.subr.bf16.mxu0 %v1248
    %1372 = vmatpush1.bf16.msra.mxu0 %v1247
    %1373 = vmatprep.subr.bf16.mxu0 %v1252
    %1374 = vmatpush1.bf16.msra.mxu0 %v1251
    %1375 = vmatprep.subr.bf16.mxu0 %v1256
    %1376 = vmatpush1.bf16.msra.mxu0 %v1255
    %1377 = vmatprep.subr.bf16.mxu0 %v1260
    %1378 = vmatpush1.bf16.msra.mxu0 %v1259
    %1379 = vmatprep.subr.bf16.mxu0 %v1264
    %1380 = vmatpush1.bf16.msra.mxu0 %v1263
    %1381 = vmatprep.subr.bf16.mxu0 %v1268
    %1382 = vmatpush1.bf16.msra.mxu0 %v1267
    %1383 = vmatprep.subr.bf16.mxu0 %v1272
    %1384 = vmatpush1.bf16.msra.mxu0 %v1271
    %1385 = vmatprep.subr.bf16.mxu0 %v1276
    %1386 = vmatpush1.bf16.msra.mxu0 %v1275
    %1387 = vmatprep.subr.bf16.mxu0 %v1280
    %1388 = vmatpush1.bf16.msra.mxu0 %v1279
    %1389 = vmatprep.subr.bf16.mxu0 %v1284
    %1390 = vmatpush1.bf16.msra.mxu0 %v1283
    %1391 = vmatprep.subr.bf16.mxu0 %v1288
    %1392 = vmatpush1.bf16.msra.mxu0 %v1287
    %1393 = vmatprep.subr.bf16.mxu0 %v1292
    %1394 = vmatpush1.bf16.msra.mxu0 %v1291
    %1395 = vmatprep.subr.bf16.mxu0 %v1296
    %1396 = vmatpush1.bf16.msra.mxu0 %v1295
    %1397 = vmatprep.subr.bf16.mxu0 %v1300
    %1398 = vmatpush1.bf16.msra.mxu0 %v1299
    %1399 = vmatprep.mubr.bf16.mxu0 %v916
    %1400 = vmatmul.mubr.bf16.gmra.mrb[0].mxu0 %v915
    %v1401 = vpop.f32.mrb[0].mxu0
    %v1402 = vadd.f32 0.0, %v1401
    %v1403 = vpop.f32.mrb[0].mxu0
    %v1404 = vadd.f32 0.0, %v1403
    %v1405 = vpop.f32.mrb[0].mxu0
    %v1406 = vadd.f32 0.0, %v1405
    %v1407 = vpop.f32.mrb[0].mxu0
    %v1408 = vadd.f32 0.0, %v1407
    %1409 = vdwg.mxu0
    %1410 = vmatprep.subr.bf16.mxu0 %v1242
    %1411 = vmatpush1.bf16.msra.mxu0 %v1241
    %1412 = vmatprep.subr.bf16.mxu0 %v1246
    %1413 = vmatpush1.bf16.msra.mxu0 %v1245
    %1414 = vmatprep.subr.bf16.mxu0 %v1250
    %1415 = vmatpush1.bf16.msra.mxu0 %v1249
    %1416 = vmatprep.subr.bf16.mxu0 %v1254
    %1417 = vmatpush1.bf16.msra.mxu0 %v1253
    %1418 = vmatprep.subr.bf16.mxu0 %v1258
    %1419 = vmatpush1.bf16.msra.mxu0 %v1257
    %1420 = vmatprep.subr.bf16.mxu0 %v1262
    %1421 = vmatpush1.bf16.msra.mxu0 %v1261
    %1422 = vmatprep.subr.bf16.mxu0 %v1266
    %1423 = vmatpush1.bf16.msra.mxu0 %v1265
    %1424 = vmatprep.subr.bf16.mxu0 %v1270
    %1425 = vmatpush1.bf16.msra.mxu0 %v1269
    %1426 = vmatprep.subr.bf16.mxu0 %v1274
    %1427 = vmatpush1.bf16.msra.mxu0 %v1273
    %1428 = vmatprep.subr.bf16.mxu0 %v1278
    %1429 = vmatpush1.bf16.msra.mxu0 %v1277
    %1430 = vmatprep.subr.bf16.mxu0 %v1282
    %1431 = vmatpush1.bf16.msra.mxu0 %v1281
    %1432 = vmatprep.subr.bf16.mxu0 %v1286
    %1433 = vmatpush1.bf16.msra.mxu0 %v1285
    %1434 = vmatprep.subr.bf16.mxu0 %v1290
    %1435 = vmatpush1.bf16.msra.mxu0 %v1289
    %1436 = vmatprep.subr.bf16.mxu0 %v1294
    %1437 = vmatpush1.bf16.msra.mxu0 %v1293
    %1438 = vmatprep.subr.bf16.mxu0 %v1298
    %1439 = vmatpush1.bf16.msra.mxu0 %v1297
    %1440 = vmatprep.subr.bf16.mxu0 %v1302
    %1441 = vmatpush1.bf16.msra.mxu0 %v1301
    %1442 = vmatprep.mubr.bf16.mxu0 %v916
    %1443 = vmatmul.mubr.bf16.gmra.mrb[0].mxu0 %v915
    %v1444 = vpop.f32.mrb[0].mxu0
    %v1445 = vadd.f32 0.0, %v1444
    %v1446 = vpop.f32.mrb[0].mxu0
    %v1447 = vadd.f32 0.0, %v1446
    %v1448 = vpop.f32.mrb[0].mxu0
    %v1449 = vadd.f32 0.0, %v1448
    %v1450 = vpop.f32.mrb[0].mxu0
    %v1451 = vadd.f32 0.0, %v1450
    %1452 = vdwg.mxu0
    %v1517 = vunpack.c.l.b16 %v919
    %v1518 = vunpack.c.h.b16 %v919
    %v1519 = vunpack.c.l.b16 %v920
    %v1520 = vunpack.c.h.b16 %v920
    %v1521 = vunpack.c.l.b16 %v921
    %v1522 = vunpack.c.h.b16 %v921
    %v1523 = vunpack.c.l.b16 %v922
    %v1524 = vunpack.c.h.b16 %v922
    %v1525 = vunpack.c.l.b16 %v923
    %v1526 = vunpack.c.h.b16 %v923
    %v1527 = vunpack.c.l.b16 %v924
    %v1528 = vunpack.c.h.b16 %v924
    %v1529 = vunpack.c.l.b16 %v925
    %v1530 = vunpack.c.h.b16 %v925
    %v1531 = vunpack.c.l.b16 %v926
    %v1532 = vunpack.c.h.b16 %v926
    %v1533 = vunpack.c.l.b16 %v927
    %v1534 = vunpack.c.h.b16 %v927
    %v1535 = vunpack.c.l.b16 %v928
    %v1536 = vunpack.c.h.b16 %v928
    %v1537 = vunpack.c.l.b16 %v929
    %v1538 = vunpack.c.h.b16 %v929
    %v1539 = vunpack.c.l.b16 %v930
    %v1540 = vunpack.c.h.b16 %v930
    %v1541 = vunpack.c.l.b16 %v931
    %v1542 = vunpack.c.h.b16 %v931
    %v1543 = vunpack.c.l.b16 %v932
    %v1544 = vunpack.c.h.b16 %v932
    %v1545 = vunpack.c.l.b16 %v933
    %v1546 = vunpack.c.h.b16 %v933
    %v1547 = vunpack.c.l.b16 %v934
    %v1548 = vunpack.c.h.b16 %v934
    %v1549 = vunpack.c.l.b16 %v935
    %v1550 = vunpack.c.h.b16 %v935
    %v1551 = vunpack.c.l.b16 %v936
    %v1552 = vunpack.c.h.b16 %v936
    %v1553 = vunpack.c.l.b16 %v937
    %v1554 = vunpack.c.h.b16 %v937
    %v1555 = vunpack.c.l.b16 %v938
    %v1556 = vunpack.c.h.b16 %v938
    %v1557 = vunpack.c.l.b16 %v939
    %v1558 = vunpack.c.h.b16 %v939
    %v1559 = vunpack.c.l.b16 %v940
    %v1560 = vunpack.c.h.b16 %v940
    %v1561 = vunpack.c.l.b16 %v941
    %v1562 = vunpack.c.h.b16 %v941
    %v1563 = vunpack.c.l.b16 %v942
    %v1564 = vunpack.c.h.b16 %v942
    %v1565 = vunpack.c.l.b16 %v943
    %v1566 = vunpack.c.h.b16 %v943
    %v1567 = vunpack.c.l.b16 %v944
    %v1568 = vunpack.c.h.b16 %v944
    %v1569 = vunpack.c.l.b16 %v945
    %v1570 = vunpack.c.h.b16 %v945
    %v1571 = vunpack.c.l.b16 %v946
    %v1572 = vunpack.c.h.b16 %v946
    %v1573 = vunpack.c.l.b16 %v947
    %v1574 = vunpack.c.h.b16 %v947
    %v1575 = vunpack.c.l.b16 %v948
    %v1576 = vunpack.c.h.b16 %v948
    %v1577 = vunpack.c.l.b16 %v949
    %v1578 = vunpack.c.h.b16 %v949
    %v1579 = vunpack.c.l.b16 %v950
    %v1580 = vunpack.c.h.b16 %v950
    %v1581 = vunpack.c.l.b16 %v951
    %v1582 = vunpack.c.h.b16 %v951
    %v1583 = vunpack.c.l.b16 %v952
    %v1584 = vunpack.c.h.b16 %v952
    %v1585 = vunpack.c.l.b16 %v953
    %v1586 = vunpack.c.h.b16 %v953
    %v1587 = vunpack.c.l.b16 %v954
    %v1588 = vunpack.c.h.b16 %v954
    %v1589 = vunpack.c.l.b16 %v955
    %v1590 = vunpack.c.h.b16 %v955
    %v1591 = vunpack.c.l.b16 %v956
    %v1592 = vunpack.c.h.b16 %v956
    %v1593 = vunpack.c.l.b16 %v957
    %v1594 = vunpack.c.h.b16 %v957
    %v1595 = vunpack.c.l.b16 %v958
    %v1596 = vunpack.c.h.b16 %v958
    %v1597 = vunpack.c.l.b16 %v959
    %v1598 = vunpack.c.h.b16 %v959
    %v1599 = vunpack.c.l.b16 %v960
    %v1600 = vunpack.c.h.b16 %v960
    %v1601 = vunpack.c.l.b16 %v961
    %v1602 = vunpack.c.h.b16 %v961
    %v1603 = vunpack.c.l.b16 %v962
    %v1604 = vunpack.c.h.b16 %v962
    %v1605 = vunpack.c.l.b16 %v963
    %v1606 = vunpack.c.h.b16 %v963
    %v1607 = vunpack.c.l.b16 %v964
    %v1608 = vunpack.c.h.b16 %v964
    %v1609 = vunpack.c.l.b16 %v965
    %v1610 = vunpack.c.h.b16 %v965
    %v1611 = vunpack.c.l.b16 %v966
    %v1612 = vunpack.c.h.b16 %v966
    %v1613 = vunpack.c.l.b16 %v967
    %v1614 = vunpack.c.h.b16 %v967
    %v1615 = vunpack.c.l.b16 %v968
    %v1616 = vunpack.c.h.b16 %v968
    %v1617 = vunpack.c.l.b16 %v969
    %v1618 = vunpack.c.h.b16 %v969
    %v1619 = vunpack.c.l.b16 %v970
    %v1620 = vunpack.c.h.b16 %v970
    %v1621 = vunpack.c.l.b16 %v971
    %v1622 = vunpack.c.h.b16 %v971
    %v1623 = vunpack.c.l.b16 %v972
    %v1624 = vunpack.c.h.b16 %v972
    %v1625 = vunpack.c.l.b16 %v973
    %v1626 = vunpack.c.h.b16 %v973
    %v1627 = vunpack.c.l.b16 %v974
    %v1628 = vunpack.c.h.b16 %v974
    %v1629 = vunpack.c.l.b16 %v975
    %v1630 = vunpack.c.h.b16 %v975
    %v1631 = vunpack.c.l.b16 %v976
    %v1632 = vunpack.c.h.b16 %v976
    %v1633 = vunpack.c.l.b16 %v977
    %v1634 = vunpack.c.h.b16 %v977
    %v1635 = vunpack.c.l.b16 %v978
    %v1636 = vunpack.c.h.b16 %v978
    %v1637 = vunpack.c.l.b16 %v979
    %v1638 = vunpack.c.h.b16 %v979
    %v1639 = vunpack.c.l.b16 %v980
    %v1640 = vunpack.c.h.b16 %v980
    %v1641 = vunpack.c.l.b16 %v981
    %v1642 = vunpack.c.h.b16 %v981
    %v1643 = vunpack.c.l.b16 %v982
    %v1644 = vunpack.c.h.b16 %v982
    %v1645 = vpack.c.b16 %v1521, %v1517
    %v1646 = vpack.c.b16 %v1522, %v1518
    %v1647 = vpack.c.b16 %v1523, %v1519
    %v1648 = vpack.c.b16 %v1524, %v1520
    %v1649 = vpack.c.b16 %v1529, %v1525
    %v1650 = vpack.c.b16 %v1530, %v1526
    %v1651 = vpack.c.b16 %v1531, %v1527
    %v1652 = vpack.c.b16 %v1532, %v1528
    %v1653 = vpack.c.b16 %v1537, %v1533
    %v1654 = vpack.c.b16 %v1538, %v1534
    %v1655 = vpack.c.b16 %v1539, %v1535
    %v1656 = vpack.c.b16 %v1540, %v1536
    %v1657 = vpack.c.b16 %v1545, %v1541
    %v1658 = vpack.c.b16 %v1546, %v1542
    %v1659 = vpack.c.b16 %v1547, %v1543
    %v1660 = vpack.c.b16 %v1548, %v1544
    %v1661 = vpack.c.b16 %v1553, %v1549
    %v1662 = vpack.c.b16 %v1554, %v1550
    %v1663 = vpack.c.b16 %v1555, %v1551
    %v1664 = vpack.c.b16 %v1556, %v1552
    %v1665 = vpack.c.b16 %v1561, %v1557
    %v1666 = vpack.c.b16 %v1562, %v1558
    %v1667 = vpack.c.b16 %v1563, %v1559
    %v1668 = vpack.c.b16 %v1564, %v1560
    %v1669 = vpack.c.b16 %v1569, %v1565
    %v1670 = vpack.c.b16 %v1570, %v1566
    %v1671 = vpack.c.b16 %v1571, %v1567
    %v1672 = vpack.c.b16 %v1572, %v1568
    %v1673 = vpack.c.b16 %v1577, %v1573
    %v1674 = vpack.c.b16 %v1578, %v1574
    %v1675 = vpack.c.b16 %v1579, %v1575
    %v1676 = vpack.c.b16 %v1580, %v1576
    %v1677 = vpack.c.b16 %v1585, %v1581
    %v1678 = vpack.c.b16 %v1586, %v1582
    %v1679 = vpack.c.b16 %v1587, %v1583
    %v1680 = vpack.c.b16 %v1588, %v1584
    %v1681 = vpack.c.b16 %v1593, %v1589
    %v1682 = vpack.c.b16 %v1594, %v1590
    %v1683 = vpack.c.b16 %v1595, %v1591
    %v1684 = vpack.c.b16 %v1596, %v1592
    %v1685 = vpack.c.b16 %v1601, %v1597
    %v1686 = vpack.c.b16 %v1602, %v1598
    %v1687 = vpack.c.b16 %v1603, %v1599
    %v1688 = vpack.c.b16 %v1604, %v1600
    %v1689 = vpack.c.b16 %v1609, %v1605
    %v1690 = vpack.c.b16 %v1610, %v1606
    %v1691 = vpack.c.b16 %v1611, %v1607
    %v1692 = vpack.c.b16 %v1612, %v1608
    %v1693 = vpack.c.b16 %v1617, %v1613
    %v1694 = vpack.c.b16 %v1618, %v1614
    %v1695 = vpack.c.b16 %v1619, %v1615
    %v1696 = vpack.c.b16 %v1620, %v1616
    %v1697 = vpack.c.b16 %v1625, %v1621
    %v1698 = vpack.c.b16 %v1626, %v1622
    %v1699 = vpack.c.b16 %v1627, %v1623
    %v1700 = vpack.c.b16 %v1628, %v1624
    %v1701 = vpack.c.b16 %v1633, %v1629
    %v1702 = vpack.c.b16 %v1634, %v1630
    %v1703 = vpack.c.b16 %v1635, %v1631
    %v1704 = vpack.c.b16 %v1636, %v1632
    %v1705 = vpack.c.b16 %v1641, %v1637
    %v1706 = vpack.c.b16 %v1642, %v1638
    %v1707 = vpack.c.b16 %v1643, %v1639
    %v1708 = vpack.c.b16 %v1644, %v1640
    %1773 = vmatprep.subr.bf16.mxu0 %v1646
    %1774 = vmatpush1.bf16.msra.mxu0 %v1645
    %1775 = vmatprep.subr.bf16.mxu0 %v1650
    %1776 = vmatpush1.bf16.msra.mxu0 %v1649
    %1777 = vmatprep.subr.bf16.mxu0 %v1654
    %1778 = vmatpush1.bf16.msra.mxu0 %v1653
    %1779 = vmatprep.subr.bf16.mxu0 %v1658
    %1780 = vmatpush1.bf16.msra.mxu0 %v1657
    %1781 = vmatprep.subr.bf16.mxu0 %v1662
    %1782 = vmatpush1.bf16.msra.mxu0 %v1661
    %1783 = vmatprep.subr.bf16.mxu0 %v1666
    %1784 = vmatpush1.bf16.msra.mxu0 %v1665
    %1785 = vmatprep.subr.bf16.mxu0 %v1670
    %1786 = vmatpush1.bf16.msra.mxu0 %v1669
    %1787 = vmatprep.subr.bf16.mxu0 %v1674
    %1788 = vmatpush1.bf16.msra.mxu0 %v1673
    %1789 = vmatprep.subr.bf16.mxu0 %v1678
    %1790 = vmatpush1.bf16.msra.mxu0 %v1677
    %1791 = vmatprep.subr.bf16.mxu0 %v1682
    %1792 = vmatpush1.bf16.msra.mxu0 %v1681
    %1793 = vmatprep.subr.bf16.mxu0 %v1686
    %1794 = vmatpush1.bf16.msra.mxu0 %v1685
    %1795 = vmatprep.subr.bf16.mxu0 %v1690
    %1796 = vmatpush1.bf16.msra.mxu0 %v1689
    %1797 = vmatprep.subr.bf16.mxu0 %v1694
    %1798 = vmatpush1.bf16.msra.mxu0 %v1693
    %1799 = vmatprep.subr.bf16.mxu0 %v1698
    %1800 = vmatpush1.bf16.msra.mxu0 %v1697
    %1801 = vmatprep.subr.bf16.mxu0 %v1702
    %1802 = vmatpush1.bf16.msra.mxu0 %v1701
    %1803 = vmatprep.subr.bf16.mxu0 %v1706
    %1804 = vmatpush1.bf16.msra.mxu0 %v1705
    %1805 = vmatprep.mubr.bf16.mxu0 %v914
    %1806 = vmatmul.mubr.bf16.gmra.mrb[0].mxu0 %v913
    %v1807 = vpop.f32.mrb[0].mxu0
    %v1808 = vadd.f32 %v1402, %v1807
    %v1809 = vpop.f32.mrb[0].mxu0
    %v1810 = vadd.f32 %v1404, %v1809
    %v1811 = vpop.f32.mrb[0].mxu0
    %v1812 = vadd.f32 %v1406, %v1811
    %v1813 = vpop.f32.mrb[0].mxu0
    %v1814 = vadd.f32 %v1408, %v1813
    %1815 = vdwg.mxu0
    %1816 = vmatprep.subr.bf16.mxu0 %v1648
    %1817 = vmatpush1.bf16.msra.mxu0 %v1647
    %1818 = vmatprep.subr.bf16.mxu0 %v1652
    %1819 = vmatpush1.bf16.msra.mxu0 %v1651
    %1820 = vmatprep.subr.bf16.mxu0 %v1656
    %1821 = vmatpush1.bf16.msra.mxu0 %v1655
    %1822 = vmatprep.subr.bf16.mxu0 %v1660
    %1823 = vmatpush1.bf16.msra.mxu0 %v1659
    %1824 = vmatprep.subr.bf16.mxu0 %v1664
    %1825 = vmatpush1.bf16.msra.mxu0 %v1663
    %1826 = vmatprep.subr.bf16.mxu0 %v1668
    %1827 = vmatpush1.bf16.msra.mxu0 %v1667
    %1828 = vmatprep.subr.bf16.mxu0 %v1672
    %1829 = vmatpush1.bf16.msra.mxu0 %v1671
    %1830 = vmatprep.subr.bf16.mxu0 %v1676
    %1831 = vmatpush1.bf16.msra.mxu0 %v1675
    %1832 = vmatprep.subr.bf16.mxu0 %v1680
    %1833 = vmatpush1.bf16.msra.mxu0 %v1679
    %1834 = vmatprep.subr.bf16.mxu0 %v1684
    %1835 = vmatpush1.bf16.msra.mxu0 %v1683
    %1836 = vmatprep.subr.bf16.mxu0 %v1688
    %1837 = vmatpush1.bf16.msra.mxu0 %v1687
    %1838 = vmatprep.subr.bf16.mxu0 %v1692
    %1839 = vmatpush1.bf16.msra.mxu0 %v1691
    %1840 = vmatprep.subr.bf16.mxu0 %v1696
    %1841 = vmatpush1.bf16.msra.mxu0 %v1695
    %1842 = vmatprep.subr.bf16.mxu0 %v1700
    %1843 = vmatpush1.bf16.msra.mxu0 %v1699
    %1844 = vmatprep.subr.bf16.mxu0 %v1704
    %1845 = vmatpush1.bf16.msra.mxu0 %v1703
    %1846 = vmatprep.subr.bf16.mxu0 %v1708
    %1847 = vmatpush1.bf16.msra.mxu0 %v1707
    %1848 = vmatprep.mubr.bf16.mxu0 %v914
    %1849 = vmatmul.mubr.bf16.gmra.mrb[0].mxu0 %v913
    %v1850 = vpop.f32.mrb[0].mxu0
    %v1851 = vadd.f32 %v1445, %v1850
    %v1852 = vpop.f32.mrb[0].mxu0
    %v1853 = vadd.f32 %v1447, %v1852
    %v1854 = vpop.f32.mrb[0].mxu0
    %v1855 = vadd.f32 %v1449, %v1854
    %v1856 = vpop.f32.mrb[0].mxu0
    %v1857 = vadd.f32 %v1451, %v1856
    %1858 = vdwg.mxu0
    %v1859 = vld [vmem:[%s3 + $0x400] sm:$0xff]
    %v1860 = vld [vmem:[%s3 + $0x408] sm:$0xff]
    %v1861 = vld [vmem:[%s3 + $0x410] sm:$0xff]
    %v1862 = vld [vmem:[%s3 + $0x418] sm:$0xff]
    %v1863 = vld [vmem:[%s3 + $0x420] sm:$0xff]
    %v1864 = vld [vmem:[%s3 + $0x428] sm:$0xff]
    %v1865 = vld [vmem:[%s3 + $0x430] sm:$0xff]
    %v1866 = vld [vmem:[%s3 + $0x438] sm:$0xff]
    %v1867 = vld [vmem:[%s3 + $0x440] sm:$0xff]
    %v1868 = vld [vmem:[%s3 + $0x448] sm:$0xff]
    %v1869 = vld [vmem:[%s3 + $0x450] sm:$0xff]
    %v1870 = vld [vmem:[%s3 + $0x458] sm:$0xff]
    %v1871 = vld [vmem:[%s3 + $0x460] sm:$0xff]
    %v1872 = vld [vmem:[%s3 + $0x468] sm:$0xff]
    %v1873 = vld [vmem:[%s3 + $0x470] sm:$0xff]
    %v1874 = vld [vmem:[%s3 + $0x478] sm:$0xff]
    %v1875 = vld [vmem:[%s3 + $0x480] sm:$0xff]
    %v1876 = vld [vmem:[%s3 + $0x488] sm:$0xff]
    %v1877 = vld [vmem:[%s3 + $0x490] sm:$0xff]
    %v1878 = vld [vmem:[%s3 + $0x498] sm:$0xff]
    %v1879 = vld [vmem:[%s3 + $0x4a0] sm:$0xff]
    %v1880 = vld [vmem:[%s3 + $0x4a8] sm:$0xff]
    %v1881 = vld [vmem:[%s3 + $0x4b0] sm:$0xff]
    %v1882 = vld [vmem:[%s3 + $0x4b8] sm:$0xff]
    %v1883 = vld [vmem:[%s3 + $0x4c0] sm:$0xff]
    %v1884 = vld [vmem:[%s3 + $0x4c8] sm:$0xff]
    %v1885 = vld [vmem:[%s3 + $0x4d0] sm:$0xff]
    %v1886 = vld [vmem:[%s3 + $0x4d8] sm:$0xff]
    %v1887 = vld [vmem:[%s3 + $0x4e0] sm:$0xff]
    %v1888 = vld [vmem:[%s3 + $0x4e8] sm:$0xff]
    %v1889 = vld [vmem:[%s3 + $0x4f0] sm:$0xff]
    %v1890 = vld [vmem:[%s3 + $0x4f8] sm:$0xff]
    %v1891 = vld [vmem:[%s3 + $0x500] sm:$0xff]
    %v1892 = vld [vmem:[%s3 + $0x508] sm:$0xff]
    %v1893 = vld [vmem:[%s3 + $0x510] sm:$0xff]
    %v1894 = vld [vmem:[%s3 + $0x518] sm:$0xff]
    %v1895 = vld [vmem:[%s3 + $0x520] sm:$0xff]
    %v1896 = vld [vmem:[%s3 + $0x528] sm:$0xff]
    %v1897 = vld [vmem:[%s3 + $0x530] sm:$0xff]
    %v1898 = vld [vmem:[%s3 + $0x538] sm:$0xff]
    %v1899 = vld [vmem:[%s3 + $0x540] sm:$0xff]
    %v1900 = vld [vmem:[%s3 + $0x548] sm:$0xff]
    %v1901 = vld [vmem:[%s3 + $0x550] sm:$0xff]
    %v1902 = vld [vmem:[%s3 + $0x558] sm:$0xff]
    %v1903 = vld [vmem:[%s3 + $0x560] sm:$0xff]
    %v1904 = vld [vmem:[%s3 + $0x568] sm:$0xff]
    %v1905 = vld [vmem:[%s3 + $0x570] sm:$0xff]
    %v1906 = vld [vmem:[%s3 + $0x578] sm:$0xff]
    %v1907 = vld [vmem:[%s3 + $0x580] sm:$0xff]
    %v1908 = vld [vmem:[%s3 + $0x588] sm:$0xff]
    %v1909 = vld [vmem:[%s3 + $0x590] sm:$0xff]
    %v1910 = vld [vmem:[%s3 + $0x598] sm:$0xff]
    %v1911 = vld [vmem:[%s3 + $0x5a0] sm:$0xff]
    %v1912 = vld [vmem:[%s3 + $0x5a8] sm:$0xff]
    %v1913 = vld [vmem:[%s3 + $0x5b0] sm:$0xff]
    %v1914 = vld [vmem:[%s3 + $0x5b8] sm:$0xff]
    %v1915 = vld [vmem:[%s3 + $0x5c0] sm:$0xff]
    %v1916 = vld [vmem:[%s3 + $0x5c8] sm:$0xff]
    %v1917 = vld [vmem:[%s3 + $0x5d0] sm:$0xff]
    %v1918 = vld [vmem:[%s3 + $0x5d8] sm:$0xff]
    %v1919 = vld [vmem:[%s3 + $0x5e0] sm:$0xff]
    %v1920 = vld [vmem:[%s3 + $0x5e8] sm:$0xff]
    %v1921 = vld [vmem:[%s3 + $0x5f0] sm:$0xff]
    %v1922 = vld [vmem:[%s3 + $0x5f8] sm:$0xff]
    %v1987 = vunpack.c.l.b16 %v1859
    %v1988 = vunpack.c.h.b16 %v1859
    %v1989 = vunpack.c.l.b16 %v1860
    %v1990 = vunpack.c.h.b16 %v1860
    %v1991 = vunpack.c.l.b16 %v1861
    %v1992 = vunpack.c.h.b16 %v1861
    %v1993 = vunpack.c.l.b16 %v1862
    %v1994 = vunpack.c.h.b16 %v1862
    %v1995 = vunpack.c.l.b16 %v1863
    %v1996 = vunpack.c.h.b16 %v1863
    %v1997 = vunpack.c.l.b16 %v1864
    %v1998 = vunpack.c.h.b16 %v1864
    %v1999 = vunpack.c.l.b16 %v1865
    %v2000 = vunpack.c.h.b16 %v1865
    %v2001 = vunpack.c.l.b16 %v1866
    %v2002 = vunpack.c.h.b16 %v1866
    %v2003 = vunpack.c.l.b16 %v1867
    %v2004 = vunpack.c.h.b16 %v1867
    %v2005 = vunpack.c.l.b16 %v1868
    %v2006 = vunpack.c.h.b16 %v1868
    %v2007 = vunpack.c.l.b16 %v1869
    %v2008 = vunpack.c.h.b16 %v1869
    %v2009 = vunpack.c.l.b16 %v1870
    %v2010 = vunpack.c.h.b16 %v1870
    %v2011 = vunpack.c.l.b16 %v1871
    %v2012 = vunpack.c.h.b16 %v1871
    %v2013 = vunpack.c.l.b16 %v1872
    %v2014 = vunpack.c.h.b16 %v1872
    %v2015 = vunpack.c.l.b16 %v1873
    %v2016 = vunpack.c.h.b16 %v1873
    %v2017 = vunpack.c.l.b16 %v1874
    %v2018 = vunpack.c.h.b16 %v1874
    %v2019 = vunpack.c.l.b16 %v1875
    %v2020 = vunpack.c.h.b16 %v1875
    %v2021 = vunpack.c.l.b16 %v1876
    %v2022 = vunpack.c.h.b16 %v1876
    %v2023 = vunpack.c.l.b16 %v1877
    %v2024 = vunpack.c.h.b16 %v1877
    %v2025 = vunpack.c.l.b16 %v1878
    %v2026 = vunpack.c.h.b16 %v1878
    %v2027 = vunpack.c.l.b16 %v1879
    %v2028 = vunpack.c.h.b16 %v1879
    %v2029 = vunpack.c.l.b16 %v1880
    %v2030 = vunpack.c.h.b16 %v1880
    %v2031 = vunpack.c.l.b16 %v1881
    %v2032 = vunpack.c.h.b16 %v1881
    %v2033 = vunpack.c.l.b16 %v1882
    %v2034 = vunpack.c.h.b16 %v1882
    %v2035 = vunpack.c.l.b16 %v1883
    %v2036 = vunpack.c.h.b16 %v1883
    %v2037 = vunpack.c.l.b16 %v1884
    %v2038 = vunpack.c.h.b16 %v1884
    %v2039 = vunpack.c.l.b16 %v1885
    %v2040 = vunpack.c.h.b16 %v1885
    %v2041 = vunpack.c.l.b16 %v1886
    %v2042 = vunpack.c.h.b16 %v1886
    %v2043 = vunpack.c.l.b16 %v1887
    %v2044 = vunpack.c.h.b16 %v1887
    %v2045 = vunpack.c.l.b16 %v1888
    %v2046 = vunpack.c.h.b16 %v1888
    %v2047 = vunpack.c.l.b16 %v1889
    %v2048 = vunpack.c.h.b16 %v1889
    %v2049 = vunpack.c.l.b16 %v1890
    %v2050 = vunpack.c.h.b16 %v1890
    %v2051 = vunpack.c.l.b16 %v1891
    %v2052 = vunpack.c.h.b16 %v1891
    %v2053 = vunpack.c.l.b16 %v1892
    %v2054 = vunpack.c.h.b16 %v1892
    %v2055 = vunpack.c.l.b16 %v1893
    %v2056 = vunpack.c.h.b16 %v1893
    %v2057 = vunpack.c.l.b16 %v1894
    %v2058 = vunpack.c.h.b16 %v1894
    %v2059 = vunpack.c.l.b16 %v1895
    %v2060 = vunpack.c.h.b16 %v1895
    %v2061 = vunpack.c.l.b16 %v1896
    %v2062 = vunpack.c.h.b16 %v1896
    %v2063 = vunpack.c.l.b16 %v1897
    %v2064 = vunpack.c.h.b16 %v1897
    %v2065 = vunpack.c.l.b16 %v1898
    %v2066 = vunpack.c.h.b16 %v1898
    %v2067 = vunpack.c.l.b16 %v1899
    %v2068 = vunpack.c.h.b16 %v1899
    %v2069 = vunpack.c.l.b16 %v1900
    %v2070 = vunpack.c.h.b16 %v1900
    %v2071 = vunpack.c.l.b16 %v1901
    %v2072 = vunpack.c.h.b16 %v1901
    %v2073 = vunpack.c.l.b16 %v1902
    %v2074 = vunpack.c.h.b16 %v1902
    %v2075 = vunpack.c.l.b16 %v1903
    %v2076 = vunpack.c.h.b16 %v1903
    %v2077 = vunpack.c.l.b16 %v1904
    %v2078 = vunpack.c.h.b16 %v1904
    %v2079 = vunpack.c.l.b16 %v1905
    %v2080 = vunpack.c.h.b16 %v1905
    %v2081 = vunpack.c.l.b16 %v1906
    %v2082 = vunpack.c.h.b16 %v1906
    %v2083 = vunpack.c.l.b16 %v1907
    %v2084 = vunpack.c.h.b16 %v1907
    %v2085 = vunpack.c.l.b16 %v1908
    %v2086 = vunpack.c.h.b16 %v1908
    %v2087 = vunpack.c.l.b16 %v1909
    %v2088 = vunpack.c.h.b16 %v1909
    %v2089 = vunpack.c.l.b16 %v1910
    %v2090 = vunpack.c.h.b16 %v1910
    %v2091 = vunpack.c.l.b16 %v1911
    %v2092 = vunpack.c.h.b16 %v1911
    %v2093 = vunpack.c.l.b16 %v1912
    %v2094 = vunpack.c.h.b16 %v1912
    %v2095 = vunpack.c.l.b16 %v1913
    %v2096 = vunpack.c.h.b16 %v1913
    %v2097 = vunpack.c.l.b16 %v1914
    %v2098 = vunpack.c.h.b16 %v1914
    %v2099 = vunpack.c.l.b16 %v1915
    %v2100 = vunpack.c.h.b16 %v1915
    %v2101 = vunpack.c.l.b16 %v1916
    %v2102 = vunpack.c.h.b16 %v1916
    %v2103 = vunpack.c.l.b16 %v1917
    %v2104 = vunpack.c.h.b16 %v1917
    %v2105 = vunpack.c.l.b16 %v1918
    %v2106 = vunpack.c.h.b16 %v1918
    %v2107 = vunpack.c.l.b16 %v1919
    %v2108 = vunpack.c.h.b16 %v1919
    %v2109 = vunpack.c.l.b16 %v1920
    %v2110 = vunpack.c.h.b16 %v1920
    %v2111 = vunpack.c.l.b16 %v1921
    %v2112 = vunpack.c.h.b16 %v1921
    %v2113 = vunpack.c.l.b16 %v1922
    %v2114 = vunpack.c.h.b16 %v1922
    %v2115 = vpack.c.b16 %v1991, %v1987
    %v2116 = vpack.c.b16 %v1992, %v1988
    %v2117 = vpack.c.b16 %v1993, %v1989
    %v2118 = vpack.c.b16 %v1994, %v1990
    %v2119 = vpack.c.b16 %v1999, %v1995
    %v2120 = vpack.c.b16 %v2000, %v1996
    %v2121 = vpack.c.b16 %v2001, %v1997
    %v2122 = vpack.c.b16 %v2002, %v1998
    %v2123 = vpack.c.b16 %v2007, %v2003
    %v2124 = vpack.c.b16 %v2008, %v2004
    %v2125 = vpack.c.b16 %v2009, %v2005
    %v2126 = vpack.c.b16 %v2010, %v2006
    %v2127 = vpack.c.b16 %v2015, %v2011
    %v2128 = vpack.c.b16 %v2016, %v2012
    %v2129 = vpack.c.b16 %v2017, %v2013
    %v2130 = vpack.c.b16 %v2018, %v2014
    %v2131 = vpack.c.b16 %v2023, %v2019
    %v2132 = vpack.c.b16 %v2024, %v2020
    %v2133 = vpack.c.b16 %v2025, %v2021
    %v2134 = vpack.c.b16 %v2026, %v2022
    %v2135 = vpack.c.b16 %v2031, %v2027
    %v2136 = vpack.c.b16 %v2032, %v2028
    %v2137 = vpack.c.b16 %v2033, %v2029
    %v2138 = vpack.c.b16 %v2034, %v2030
    %v2139 = vpack.c.b16 %v2039, %v2035
    %v2140 = vpack.c.b16 %v2040, %v2036
    %v2141 = vpack.c.b16 %v2041, %v2037
    %v2142 = vpack.c.b16 %v2042, %v2038
    %v2143 = vpack.c.b16 %v2047, %v2043
    %v2144 = vpack.c.b16 %v2048, %v2044
    %v2145 = vpack.c.b16 %v2049, %v2045
    %v2146 = vpack.c.b16 %v2050, %v2046
    %v2147 = vpack.c.b16 %v2055, %v2051
    %v2148 = vpack.c.b16 %v2056, %v2052
    %v2149 = vpack.c.b16 %v2057, %v2053
    %v2150 = vpack.c.b16 %v2058, %v2054
    %v2151 = vpack.c.b16 %v2063, %v2059
    %v2152 = vpack.c.b16 %v2064, %v2060
    %v2153 = vpack.c.b16 %v2065, %v2061
    %v2154 = vpack.c.b16 %v2066, %v2062
    %v2155 = vpack.c.b16 %v2071, %v2067
    %v2156 = vpack.c.b16 %v2072, %v2068
    %v2157 = vpack.c.b16 %v2073, %v2069
    %v2158 = vpack.c.b16 %v2074, %v2070
    %v2159 = vpack.c.b16 %v2079, %v2075
    %v2160 = vpack.c.b16 %v2080, %v2076
    %v2161 = vpack.c.b16 %v2081, %v2077
    %v2162 = vpack.c.b16 %v2082, %v2078
    %v2163 = vpack.c.b16 %v2087, %v2083
    %v2164 = vpack.c.b16 %v2088, %v2084
    %v2165 = vpack.c.b16 %v2089, %v2085
    %v2166 = vpack.c.b16 %v2090, %v2086
    %v2167 = vpack.c.b16 %v2095, %v2091
    %v2168 = vpack.c.b16 %v2096, %v2092
    %v2169 = vpack.c.b16 %v2097, %v2093
    %v2170 = vpack.c.b16 %v2098, %v2094
    %v2171 = vpack.c.b16 %v2103, %v2099
    %v2172 = vpack.c.b16 %v2104, %v2100
    %v2173 = vpack.c.b16 %v2105, %v2101
    %v2174 = vpack.c.b16 %v2106, %v2102
    %v2175 = vpack.c.b16 %v2111, %v2107
    %v2176 = vpack.c.b16 %v2112, %v2108
    %v2177 = vpack.c.b16 %v2113, %v2109
    %v2178 = vpack.c.b16 %v2114, %v2110
    %2243 = vmatprep.subr.bf16.mxu0 %v2116
    %2244 = vmatpush1.bf16.msra.mxu0 %v2115
    %2245 = vmatprep.subr.bf16.mxu0 %v2120
    %2246 = vmatpush1.bf16.msra.mxu0 %v2119
    %2247 = vmatprep.subr.bf16.mxu0 %v2124
    %2248 = vmatpush1.bf16.msra.mxu0 %v2123
    %2249 = vmatprep.subr.bf16.mxu0 %v2128
    %2250 = vmatpush1.bf16.msra.mxu0 %v2127
    %2251 = vmatprep.subr.bf16.mxu0 %v2132
    %2252 = vmatpush1.bf16.msra.mxu0 %v2131
    %2253 = vmatprep.subr.bf16.mxu0 %v2136
    %2254 = vmatpush1.bf16.msra.mxu0 %v2135
    %2255 = vmatprep.subr.bf16.mxu0 %v2140
    %2256 = vmatpush1.bf16.msra.mxu0 %v2139
    %2257 = vmatprep.subr.bf16.mxu0 %v2144
    %2258 = vmatpush1.bf16.msra.mxu0 %v2143
    %2259 = vmatprep.subr.bf16.mxu0 %v2148
    %2260 = vmatpush1.bf16.msra.mxu0 %v2147
    %2261 = vmatprep.subr.bf16.mxu0 %v2152
    %2262 = vmatpush1.bf16.msra.mxu0 %v2151
    %2263 = vmatprep.subr.bf16.mxu0 %v2156
    %2264 = vmatpush1.bf16.msra.mxu0 %v2155
    %2265 = vmatprep.subr.bf16.mxu0 %v2160
    %2266 = vmatpush1.bf16.msra.mxu0 %v2159
    %2267 = vmatprep.subr.bf16.mxu0 %v2164
    %2268 = vmatpush1.bf16.msra.mxu0 %v2163
    %2269 = vmatprep.subr.bf16.mxu0 %v2168
    %2270 = vmatpush1.bf16.msra.mxu0 %v2167
    %2271 = vmatprep.subr.bf16.mxu0 %v2172
    %2272 = vmatpush1.bf16.msra.mxu0 %v2171
    %2273 = vmatprep.subr.bf16.mxu0 %v2176
    %2274 = vmatpush1.bf16.msra.mxu0 %v2175
    %2275 = vmatprep.mubr.bf16.mxu0 %v918
    %2276 = vmatmul.mubr.bf16.gmra.mrb[0].mxu0 %v917
    %v2277 = vpop.f32.mrb[0].mxu0
    %v2278 = vadd.f32 0.0, %v2277
    %v2279 = vpop.f32.mrb[0].mxu0
    %v2280 = vadd.f32 0.0, %v2279
    %v2281 = vpop.f32.mrb[0].mxu0
    %v2282 = vadd.f32 0.0, %v2281
    %v2283 = vpop.f32.mrb[0].mxu0
    %v2284 = vadd.f32 0.0, %v2283
    %2285 = vdwg.mxu0
    %2286 = vmatprep.subr.bf16.mxu0 %v2118
    %2287 = vmatpush1.bf16.msra.mxu0 %v2117
    %2288 = vmatprep.subr.bf16.mxu0 %v2122
    %2289 = vmatpush1.bf16.msra.mxu0 %v2121
    %2290 = vmatprep.subr.bf16.mxu0 %v2126
    %2291 = vmatpush1.bf16.msra.mxu0 %v2125
    %2292 = vmatprep.subr.bf16.mxu0 %v2130
    %2293 = vmatpush1.bf16.msra.mxu0 %v2129
    %2294 = vmatprep.subr.bf16.mxu0 %v2134
    %2295 = vmatpush1.bf16.msra.mxu0 %v2133
    %2296 = vmatprep.subr.bf16.mxu0 %v2138
    %2297 = vmatpush1.bf16.msra.mxu0 %v2137
    %2298 = vmatprep.subr.bf16.mxu0 %v2142
    %2299 = vmatpush1.bf16.msra.mxu0 %v2141
    %2300 = vmatprep.subr.bf16.mxu0 %v2146
    %2301 = vmatpush1.bf16.msra.mxu0 %v2145
    %2302 = vmatprep.subr.bf16.mxu0 %v2150
    %2303 = vmatpush1.bf16.msra.mxu0 %v2149
    %2304 = vmatprep.subr.bf16.mxu0 %v2154
    %2305 = vmatpush1.bf16.msra.mxu0 %v2153
    %2306 = vmatprep.subr.bf16.mxu0 %v2158
    %2307 = vmatpush1.bf16.msra.mxu0 %v2157
    %2308 = vmatprep.subr.bf16.mxu0 %v2162
    %2309 = vmatpush1.bf16.msra.mxu0 %v2161
    %2310 = vmatprep.subr.bf16.mxu0 %v2166
    %2311 = vmatpush1.bf16.msra.mxu0 %v2165
    %2312 = vmatprep.subr.bf16.mxu0 %v2170
    %2313 = vmatpush1.bf16.msra.mxu0 %v2169
    %2314 = vmatprep.subr.bf16.mxu0 %v2174
    %2315 = vmatpush1.bf16.msra.mxu0 %v2173
    %2316 = vmatprep.subr.bf16.mxu0 %v2178
    %2317 = vmatpush1.bf16.msra.mxu0 %v2177
    %2318 = vmatprep.mubr.bf16.mxu0 %v918
    %2319 = vmatmul.mubr.bf16.gmra.mrb[0].mxu0 %v917
    %v2320 = vpop.f32.mrb[0].mxu0
    %v2321 = vadd.f32 0.0, %v2320
    %v2322 = vpop.f32.mrb[0].mxu0
    %v2323 = vadd.f32 0.0, %v2322
    %v2324 = vpop.f32.mrb[0].mxu0
    %v2325 = vadd.f32 0.0, %v2324
    %v2326 = vpop.f32.mrb[0].mxu0
    %v2327 = vadd.f32 0.0, %v2326
    %2328 = vdwg.mxu0
    %v2329 = vadd.f32 %v1808, %v2278
    %v2330 = vadd.f32 %v1810, %v2280
    %v2331 = vadd.f32 %v1851, %v2321
    %v2332 = vadd.f32 %v1853, %v2323
    %v2333 = vadd.f32 %v1812, %v2282
    %v2334 = vadd.f32 %v1814, %v2284
    %v2335 = vadd.f32 %v1855, %v2325
    %v2336 = vadd.f32 %v1857, %v2327
    %v2337 = vld [vmem:[%s4] sm:$0xf]
    %v2339 = vlaneseq
    %v2340 = vshrl.u32 %v2339, 7
    %v2341 = vsub.s32 0, %v2340
    %v2342 = vrot.slane %v2337, %v2341
    %v2343 = vlaneseq
    %v2344 = vshrl.u32 %v2343, 7
    %v2345 = vsub.s32 1, %v2344
    %v2346 = vrot.slane %v2337, %v2345
    %v2347 = vlaneseq
    %v2348 = vshrl.u32 %v2347, 7
    %v2349 = vsub.s32 2, %v2348
    %v2350 = vrot.slane %v2337, %v2349
    %v2351 = vlaneseq
    %v2352 = vshrl.u32 %v2351, 7
    %v2353 = vsub.s32 3, %v2352
    %v2354 = vrot.slane %v2337, %v2353
    %v2359 = vadd.f32 %v2329, %v2342
    %v2360 = vadd.f32 %v2330, %v2346
    %v2361 = vadd.f32 %v2331, %v2350
    %v2362 = vadd.f32 %v2332, %v2354
    %v2363 = vadd.f32 %v2333, %v2342
    %v2364 = vadd.f32 %v2334, %v2346
    %v2365 = vadd.f32 %v2335, %v2350
    %v2366 = vadd.f32 %v2336, %v2354
    %v2367 = vpack.c.bf16 %v2363, %v2359
    %v2368 = vpack.c.bf16 %v2364, %v2360
    %v2369 = vpack.c.bf16 %v2365, %v2361
    %v2370 = vpack.c.bf16 %v2366, %v2362
    %v2371 = vld [vmem:[%s5] sm:$0xf]
    %v2372 = vld [vmem:[%s5 + $0x4] sm:$0xf]
    %v2373 = vld [vmem:[%s5 + $0x8] sm:$0xf]
    %v2374 = vld [vmem:[%s5 + $0xc] sm:$0xf]
    %v2375 = vld [vmem:[%s5 + $0x10] sm:$0xf]
    %v2376 = vld [vmem:[%s5 + $0x14] sm:$0xf]
    %v2377 = vld [vmem:[%s5 + $0x18] sm:$0xf]
    %v2378 = vld [vmem:[%s5 + $0x1c] sm:$0xf]
    %v2379 = vld [vmem:[%s5 + $0x20] sm:$0xf]
    %v2380 = vld [vmem:[%s5 + $0x24] sm:$0xf]
    %v2381 = vld [vmem:[%s5 + $0x28] sm:$0xf]
    %v2382 = vld [vmem:[%s5 + $0x2c] sm:$0xf]
    %v2383 = vld [vmem:[%s5 + $0x30] sm:$0xf]
    %v2384 = vld [vmem:[%s5 + $0x34] sm:$0xf]
    %v2385 = vld [vmem:[%s5 + $0x38] sm:$0xf]
    %v2386 = vld [vmem:[%s5 + $0x3c] sm:$0xf]
    %v2387 = vld [vmem:[%s5 + $0x40] sm:$0xf]
    %v2388 = vld [vmem:[%s5 + $0x44] sm:$0xf]
    %v2389 = vld [vmem:[%s5 + $0x48] sm:$0xf]
    %v2390 = vld [vmem:[%s5 + $0x4c] sm:$0xf]
    %v2391 = vld [vmem:[%s5 + $0x50] sm:$0xf]
    %v2392 = vld [vmem:[%s5 + $0x54] sm:$0xf]
    %v2393 = vld [vmem:[%s5 + $0x58] sm:$0xf]
    %v2394 = vld [vmem:[%s5 + $0x5c] sm:$0xf]
    %v2395 = vld [vmem:[%s5 + $0x60] sm:$0xf]
    %v2396 = vld [vmem:[%s5 + $0x64] sm:$0xf]
    %v2397 = vld [vmem:[%s5 + $0x68] sm:$0xf]
    %v2398 = vld [vmem:[%s5 + $0x6c] sm:$0xf]
    %v2399 = vld [vmem:[%s5 + $0x70] sm:$0xf]
    %v2400 = vld [vmem:[%s5 + $0x74] sm:$0xf]
    %v2401 = vld [vmem:[%s5 + $0x78] sm:$0xf]
    %v2402 = vld [vmem:[%s5 + $0x7c] sm:$0xf]
    %v2403 = vld [vmem:[%s5 + $0x80] sm:$0xf]
    %v2404 = vld [vmem:[%s5 + $0x84] sm:$0xf]
    %v2405 = vld [vmem:[%s5 + $0x88] sm:$0xf]
    %v2406 = vld [vmem:[%s5 + $0x8c] sm:$0xf]
    %v2407 = vld [vmem:[%s5 + $0x90] sm:$0xf]
    %v2408 = vld [vmem:[%s5 + $0x94] sm:$0xf]
    %v2409 = vld [vmem:[%s5 + $0x98] sm:$0xf]
    %v2410 = vld [vmem:[%s5 + $0x9c] sm:$0xf]
    %v2411 = vld [vmem:[%s5 + $0xa0] sm:$0xf]
    %v2412 = vld [vmem:[%s5 + $0xa4] sm:$0xf]
    %v2413 = vld [vmem:[%s5 + $0xa8] sm:$0xf]
    %v2414 = vld [vmem:[%s5 + $0xac] sm:$0xf]
    %v2415 = vld [vmem:[%s5 + $0xb0] sm:$0xf]
    %v2416 = vld [vmem:[%s5 + $0xb4] sm:$0xf]
    %v2417 = vld [vmem:[%s5 + $0xb8] sm:$0xf]
    %v2418 = vld [vmem:[%s5 + $0xbc] sm:$0xf]
    %v2419 = vld [vmem:[%s5 + $0xc0] sm:$0xf]
    %v2420 = vld [vmem:[%s5 + $0xc4] sm:$0xf]
    %v2421 = vld [vmem:[%s5 + $0xc8] sm:$0xf]
    %v2422 = vld [vmem:[%s5 + $0xcc] sm:$0xf]
    %v2423 = vld [vmem:[%s5 + $0xd0] sm:$0xf]
    %v2424 = vld [vmem:[%s5 + $0xd4] sm:$0xf]
    %v2425 = vld [vmem:[%s5 + $0xd8] sm:$0xf]
    %v2426 = vld [vmem:[%s5 + $0xdc] sm:$0xf]
    %v2427 = vld [vmem:[%s5 + $0xe0] sm:$0xf]
    %v2428 = vld [vmem:[%s5 + $0xe4] sm:$0xf]
    %v2429 = vld [vmem:[%s5 + $0xe8] sm:$0xf]
    %v2430 = vld [vmem:[%s5 + $0xec] sm:$0xf]
    %v2431 = vld [vmem:[%s5 + $0xf0] sm:$0xf]
    %v2432 = vld [vmem:[%s5 + $0xf4] sm:$0xf]
    %v2433 = vld [vmem:[%s5 + $0xf8] sm:$0xf]
    %v2434 = vld [vmem:[%s5 + $0xfc] sm:$0xf]
    %v2435 = vld [vmem:[%s6] sm:$0x1]
    %v2437 = vlaneseq
    %v2438 = vshrl.u32 %v2437, 7
    %v2439 = vsub.s32 0, %v2438
    %v2440 = vrot.slane %v2435, %v2439
    %v2506 = vunpack.c.l.b16 %v2371
    %v2507 = vunpack.c.l.b16 %v2372
    %v2508 = vunpack.c.l.b16 %v2373
    %v2509 = vunpack.c.l.b16 %v2374
    %v2510 = vunpack.c.l.b16 %v2375
    %v2511 = vunpack.c.l.b16 %v2376
    %v2512 = vunpack.c.l.b16 %v2377
    %v2513 = vunpack.c.l.b16 %v2378
    %v2514 = vunpack.c.l.b16 %v2379
    %v2515 = vunpack.c.l.b16 %v2380
    %v2516 = vunpack.c.l.b16 %v2381
    %v2517 = vunpack.c.l.b16 %v2382
    %v2518 = vunpack.c.l.b16 %v2383
    %v2519 = vunpack.c.l.b16 %v2384
    %v2520 = vunpack.c.l.b16 %v2385
    %v2521 = vunpack.c.l.b16 %v2386
    %v2522 = vunpack.c.l.b16 %v2387
    %v2523 = vunpack.c.l.b16 %v2388
    %v2524 = vunpack.c.l.b16 %v2389
    %v2525 = vunpack.c.l.b16 %v2390
    %v2526 = vunpack.c.l.b16 %v2391
    %v2527 = vunpack.c.l.b16 %v2392
    %v2528 = vunpack.c.l.b16 %v2393
    %v2529 = vunpack.c.l.b16 %v2394
    %v2530 = vunpack.c.l.b16 %v2395
    %v2531 = vunpack.c.l.b16 %v2396
    %v2532 = vunpack.c.l.b16 %v2397
    %v2533 = vunpack.c.l.b16 %v2398
    %v2534 = vunpack.c.l.b16 %v2399
    %v2535 = vunpack.c.l.b16 %v2400
    %v2536 = vunpack.c.l.b16 %v2401
    %v2537 = vunpack.c.l.b16 %v2402
    %v2538 = vunpack.c.l.b16 %v2403
    %v2539 = vunpack.c.l.b16 %v2404
    %v2540 = vunpack.c.l.b16 %v2405
    %v2541 = vunpack.c.l.b16 %v2406
    %v2542 = vunpack.c.l.b16 %v2407
    %v2543 = vunpack.c.l.b16 %v2408
    %v2544 = vunpack.c.l.b16 %v2409
    %v2545 = vunpack.c.l.b16 %v2410
    %v2546 = vunpack.c.l.b16 %v2411
    %v2547 = vunpack.c.l.b16 %v2412
    %v2548 = vunpack.c.l.b16 %v2413
    %v2549 = vunpack.c.l.b16 %v2414
    %v2550 = vunpack.c.l.b16 %v2415
    %v2551 = vunpack.c.l.b16 %v2416
    %v2552 = vunpack.c.l.b16 %v2417
    %v2553 = vunpack.c.l.b16 %v2418
    %v2554 = vunpack.c.l.b16 %v2419
    %v2555 = vunpack.c.l.b16 %v2420
    %v2556 = vunpack.c.l.b16 %v2421
    %v2557 = vunpack.c.l.b16 %v2422
    %v2558 = vunpack.c.l.b16 %v2423
    %v2559 = vunpack.c.l.b16 %v2424
    %v2560 = vunpack.c.l.b16 %v2425
    %v2561 = vunpack.c.l.b16 %v2426
    %v2562 = vunpack.c.l.b16 %v2427
    %v2563 = vunpack.c.l.b16 %v2428
    %v2564 = vunpack.c.l.b16 %v2429
    %v2565 = vunpack.c.l.b16 %v2430
    %v2566 = vunpack.c.l.b16 %v2431
    %v2567 = vunpack.c.l.b16 %v2432
    %v2568 = vunpack.c.l.b16 %v2433
    %v2569 = vunpack.c.l.b16 %v2434
    %v2570 = vpack.c.b16 %v2507, %v2506
    %v2571 = vpack.c.b16 %v2509, %v2508
    %v2572 = vpack.c.b16 %v2511, %v2510
    %v2573 = vpack.c.b16 %v2513, %v2512
    %v2574 = vpack.c.b16 %v2515, %v2514
    %v2575 = vpack.c.b16 %v2517, %v2516
    %v2576 = vpack.c.b16 %v2519, %v2518
    %v2577 = vpack.c.b16 %v2521, %v2520
    %v2578 = vpack.c.b16 %v2523, %v2522
    %v2579 = vpack.c.b16 %v2525, %v2524
    %v2580 = vpack.c.b16 %v2527, %v2526
    %v2581 = vpack.c.b16 %v2529, %v2528
    %v2582 = vpack.c.b16 %v2531, %v2530
    %v2583 = vpack.c.b16 %v2533, %v2532
    %v2584 = vpack.c.b16 %v2535, %v2534
    %v2585 = vpack.c.b16 %v2537, %v2536
    %v2586 = vpack.c.b16 %v2539, %v2538
    %v2587 = vpack.c.b16 %v2541, %v2540
    %v2588 = vpack.c.b16 %v2543, %v2542
    %v2589 = vpack.c.b16 %v2545, %v2544
    %v2590 = vpack.c.b16 %v2547, %v2546
    %v2591 = vpack.c.b16 %v2549, %v2548
    %v2592 = vpack.c.b16 %v2551, %v2550
    %v2593 = vpack.c.b16 %v2553, %v2552
    %v2594 = vpack.c.b16 %v2555, %v2554
    %v2595 = vpack.c.b16 %v2557, %v2556
    %v2596 = vpack.c.b16 %v2559, %v2558
    %v2597 = vpack.c.b16 %v2561, %v2560
    %v2598 = vpack.c.b16 %v2563, %v2562
    %v2599 = vpack.c.b16 %v2565, %v2564
    %v2600 = vpack.c.b16 %v2567, %v2566
    %v2601 = vpack.c.b16 %v2569, %v2568
    %2634 = vmatprep.subr.bf16.mxu0 0
    %2635 = vmatpush1.bf16.msra.mxu0 %v2570
    %2636 = vmatprep.subr.bf16.mxu0 0
    %2637 = vmatpush1.bf16.msra.mxu0 %v2571
    %2638 = vmatprep.subr.bf16.mxu0 0
    %2639 = vmatpush1.bf16.msra.mxu0 %v2572
    %2640 = vmatprep.subr.bf16.mxu0 0
    %2641 = vmatpush1.bf16.msra.mxu0 %v2573
    %2642 = vmatprep.subr.bf16.mxu0 0
    %2643 = vmatpush1.bf16.msra.mxu0 %v2574
    %2644 = vmatprep.subr.bf16.mxu0 0
    %2645 = vmatpush1.bf16.msra.mxu0 %v2575
    %2646 = vmatprep.subr.bf16.mxu0 0
    %2647 = vmatpush1.bf16.msra.mxu0 %v2576
    %2648 = vmatprep.subr.bf16.mxu0 0
    %2649 = vmatpush1.bf16.msra.mxu0 %v2577
    %2650 = vmatprep.subr.bf16.mxu0 0
    %2651 = vmatpush1.bf16.msra.mxu0 %v2578
    %2652 = vmatprep.subr.bf16.mxu0 0
    %2653 = vmatpush1.bf16.msra.mxu0 %v2579
    %2654 = vmatprep.subr.bf16.mxu0 0
    %2655 = vmatpush1.bf16.msra.mxu0 %v2580
    %2656 = vmatprep.subr.bf16.mxu0 0
    %2657 = vmatpush1.bf16.msra.mxu0 %v2581
    %2658 = vmatprep.subr.bf16.mxu0 0
    %2659 = vmatpush1.bf16.msra.mxu0 %v2582
    %2660 = vmatprep.subr.bf16.mxu0 0
    %2661 = vmatpush1.bf16.msra.mxu0 %v2583
    %2662 = vmatprep.subr.bf16.mxu0 0
    %2663 = vmatpush1.bf16.msra.mxu0 %v2584
    %2664 = vmatprep.subr.bf16.mxu0 0
    %2665 = vmatpush1.bf16.msra.mxu0 %v2585
    %2666 = vmatprep.mubr.bf16.mxu0 %v2368
    %2667 = vmatmul.mubr.bf16.gmra.mrb[0].mxu0 %v2367
    %v2668 = vpop.f32.mrb[0].mxu0
    %v2669 = vadd.f32 %v2440, %v2668
    %v2670 = vpop.f32.mrb[0].mxu0
    %v2671 = vpop.f32.mrb[0].mxu0
    %v2672 = vadd.f32 %v2440, %v2671
    %v2673 = vpop.f32.mrb[0].mxu0
    %2674 = vdwg.mxu0
    %2675 = vmatprep.subr.bf16.mxu0 0
    %2676 = vmatpush1.bf16.msra.mxu0 %v2586
    %2677 = vmatprep.subr.bf16.mxu0 0
    %2678 = vmatpush1.bf16.msra.mxu0 %v2587
    %2679 = vmatprep.subr.bf16.mxu0 0
    %2680 = vmatpush1.bf16.msra.mxu0 %v2588
    %2681 = vmatprep.subr.bf16.mxu0 0
    %2682 = vmatpush1.bf16.msra.mxu0 %v2589
    %2683 = vmatprep.subr.bf16.mxu0 0
    %2684 = vmatpush1.bf16.msra.mxu0 %v2590
    %2685 = vmatprep.subr.bf16.mxu0 0
    %2686 = vmatpush1.bf16.msra.mxu0 %v2591
    %2687 = vmatprep.subr.bf16.mxu0 0
    %2688 = vmatpush1.bf16.msra.mxu0 %v2592
    %2689 = vmatprep.subr.bf16.mxu0 0
    %2690 = vmatpush1.bf16.msra.mxu0 %v2593
    %2691 = vmatprep.subr.bf16.mxu0 0
    %2692 = vmatpush1.bf16.msra.mxu0 %v2594
    %2693 = vmatprep.subr.bf16.mxu0 0
    %2694 = vmatpush1.bf16.msra.mxu0 %v2595
    %2695 = vmatprep.subr.bf16.mxu0 0
    %2696 = vmatpush1.bf16.msra.mxu0 %v2596
    %2697 = vmatprep.subr.bf16.mxu0 0
    %2698 = vmatpush1.bf16.msra.mxu0 %v2597
    %2699 = vmatprep.subr.bf16.mxu0 0
    %2700 = vmatpush1.bf16.msra.mxu0 %v2598
    %2701 = vmatprep.subr.bf16.mxu0 0
    %2702 = vmatpush1.bf16.msra.mxu0 %v2599
    %2703 = vmatprep.subr.bf16.mxu0 0
    %2704 = vmatpush1.bf16.msra.mxu0 %v2600
    %2705 = vmatprep.subr.bf16.mxu0 0
    %2706 = vmatpush1.bf16.msra.mxu0 %v2601
    %2707 = vmatprep.mubr.bf16.mxu0 %v2370
    %2708 = vmatmul.mubr.bf16.gmra.mrb[0].mxu0 %v2369
    %v2709 = vpop.f32.mrb[0].mxu0
    %v2710 = vadd.f32 %v2669, %v2709
    %v2711 = vpop.f32.mrb[0].mxu0
    %v2712 = vpop.f32.mrb[0].mxu0
    %v2713 = vadd.f32 %v2672, %v2712
    %v2714 = vpop.f32.mrb[0].mxu0
    %2715 = vdwg.mxu0
    %2716 = vst [vmem:[#allocation2] sm:$0xff] %v2710
    %2717 = vst [vmem:[#allocation2 + $0x8] sm:$0xff] %v2713
    // Predicated region
    $region30: #{robot_actor_forward.1} parent=1 // pred_check
      _
    $region31: #{robot_actor_forward.1} parent=1 // pred_check_branch
      %2719 = sbr.rel (0) target = $region33
    $region32: #{robot_actor_forward.1} parent=1 // pred_region
      %s2721 = ssub.s32 256, 256
      %2722 = vsyncadd [#allocation3], %s2721
      %s2723 = sshll.u32 [#allocation2], 4
      %s2724 = int_to_ptr.vmem [resolvable:$true] %s2723
      %2729 = dma.vmem_to_hbm [thread:$0]  %s2724, 256, %s7, [#allocation3], 128, 128, 8
    $region33: #{robot_actor_forward.1} parent=1 // pred_fallthru
      _
    // Predicated region
    $region34: #{robot_actor_forward.1} parent=1 // pred_check
      _
    $region35: #{robot_actor_forward.1} parent=1 // pred_check_branch
      %2731 = sbr.rel (0) target = $region37
    $region36: #{robot_actor_forward.1} parent=1 // pred_region
      %2732 = dma.done [#allocation3], 256
    $region37: #{robot_actor_forward.1} parent=1 // pred_fallthru
      _
    %2733 = vsyncpa [#allocation3], 1

</llo_original>
